<compile_context>
chip_gen: v5e
topology: v5e:2x2
jax: 0.10.0
libtpu: 0.0.40
codegen_flags: <defaults>
</compile_context>

<pallas_src>
import functools

import jax
import jax.numpy as jnp
from jax.experimental import pallas as pl
from jax.experimental.pallas import tpu as pltpu

# Padded (lane-dense) dimensions.
HP = 128     # hidden (32 -> 128)
H2P = 128    # 2*hidden (64 -> 128)
CP = 128     # num_class (8 -> 128)
KP = 128     # edge-feature dim (7 -> 128)
LANE = 128
SUB = 8


def _round_up(x, m):
    return ((x + m - 1) // m) * m


# ----------------------------------------------------------------------------
# Fused kernel: entire VirtualnodeNet forward, everything VMEM/vreg-resident.
# ----------------------------------------------------------------------------
def _fused_kernel(scal_ref,                       # SMEM: [eps_0..eps_{L-1}, a1_0,a2_0,...]
                  x0_ref, gsp_ref, sdst_ref, bb_ref, ea_ref,
                  we_ref, be_ref,
                  w1_ref, b1_ref, w2_ref, b2_ref,
                  vw1_ref, vb1_ref, vw2_ref, vb2_ref,
                  pmean_ref, wp_ref, bp_ref,
                  out_ref, *, L):
    f32 = jnp.float32
    bf16 = jnp.bfloat16
    EP = ea_ref.shape[0]        # padded edge count
    GP = pmean_ref.shape[0]     # padded graph count

    def mm(a, b):
        # bf16 MXU feed, f32 accumulation; post-matmul math stays f32 (v5e-safe).
        return jnp.dot(a.astype(bf16), b.astype(bf16),
                       preferred_element_type=f32)

    gsp = gsp_ref[...]          # [EP+GP, NP] stacked gather(src) + add-pool operator
    sdst = sdst_ref[...]        # [NP, EP]    scatter-add(dst) operator (lane-major)
    bb = bb_ref[...]            # [NP, GP]    vn[batch] broadcast operator
    ea = ea_ref[...]            # [EP, KP]    edge attributes (zero-padded)

    x = x0_ref[...]                                             # [NP, HP] f32
    vn = jnp.zeros((GP, HP), f32)                               # vn init = 0

    for i in range(L):                                          # static unroll
        eps = scal_ref[i]
        # xs[i] = xs[i] + virtualnode_embedding[batch]  (vn == 0 at layer 0)
        xi = x if i == 0 else x + mm(bb, vn)
        xi_bf = xi.astype(bf16)                                 # one cast, reused
        # One MXU pass shared by gather(src) and global_add_pool.
        gx = mm(gsp, xi_bf)                                     # [EP+GP, HP] f32
        x_src = gx[:EP]
        # Per-layer bond encoder (nothing kept live across layers).
        e_emb = mm(ea, we_ref[i]) + be_ref[i]                   # [EP, HP]
        # GinConv: h = MLP((1+eps)*x + sum_{j->i} relu(x_j + bond(e)))
        msg = jnp.maximum(x_src + e_emb, 0.0)
        h = mm(sdst, msg) + (1.0 + eps) * xi
        h = jnp.maximum(mm(h, w1_ref[i]) + b1_ref[i], 0.0)      # Linear->BN(folded)->ReLU
        x_next = mm(h, w2_ref[i]) + b2_ref[i]                   # Linear
        if i < L - 1:
            # vn = PReLU(BNf(Lin(PReLU(BNf(Lin(add_pool(xs[i]) + vn))))))
            a1 = scal_ref[L + 2 * i]
            a2 = scal_ref[L + 2 * i + 1]
            vt = gx[EP:] + vn                                   # add-pool rows of gx
            v = mm(vt, vw1_ref[i]) + vb1_ref[i]
            v = jnp.where(v >= 0.0, v, a1 * v)
            v = mm(v, vw2_ref[i]) + vb2_ref[i]
            vn = jnp.where(v >= 0.0, v, a2 * v)
        x = x_next

    # JK == 'last'; eval dropout = identity; mean pool (1/count folded into
    # pmean) and prediction head (1/T folded into Wp/bp).
    hg = mm(pmean_ref[...], x)                                  # [GP, HP]
    out_ref[...] = mm(hg, wp_ref[...]) + bp_ref[...]            # [GP, CP] lane-dense


def _fused_call(prep, x0, gsp, sdst, bb, ea, pmean):
    L = int(prep["W1_all"].shape[0])
    NP = x0.shape[0]
    EP = ea.shape[0]
    GP = pmean.shape[0]

    inputs = (prep["scalars"], x0, gsp, sdst, bb, ea,
              prep["We_all"], prep["be_all"],
              prep["W1_all"], prep["b1_all"], prep["W2_all"], prep["b2_all"],
              prep["vW1_all"], prep["vb1_all"], prep["vW2_all"], prep["vb2_all"],
              pmean, prep["Wp"], prep["bp"])

    flops = 2 * (L * ((EP + GP) * NP * HP + EP * KP * HP + NP * EP * HP
                      + NP * HP * H2P + NP * H2P * HP)
                 + max(L - 1, 0) * (NP * GP * HP + GP * HP * H2P + GP * H2P * HP)
                 + GP * NP * HP + GP * HP * CP)
    bytes_accessed = sum(int(a.size) * a.dtype.itemsize for a in inputs) + GP * CP * 4

    in_specs = ([pl.BlockSpec(memory_space=pltpu.MemorySpace.SMEM)]
                + [pl.BlockSpec(memory_space=pltpu.MemorySpace.VMEM)]
                * (len(inputs) - 1))

    return pl.pallas_call(
        functools.partial(_fused_kernel, L=L),
        out_shape=jax.ShapeDtypeStruct((GP, CP), jnp.float32),
        in_specs=in_specs,
        out_specs=pl.BlockSpec(memory_space=pltpu.MemorySpace.VMEM),
        compiler_params=pltpu.CompilerParams(vmem_limit_bytes=64 * 1024 * 1024),
        cost_estimate=pl.CostEstimate(flops=flops, transcendentals=0,
                                      bytes_accessed=bytes_accessed),
    )(*inputs)


# ----------------------------------------------------------------------------
# Parameter preparation: pad to lane-dense shapes, stack per-layer weights,
# cast matmul operands to bf16, fold 1/T into the head, pack eps / PReLU
# alphas into one SMEM vector.
# ----------------------------------------------------------------------------
def _pad2(a, rows, cols, dtype):
    a = jnp.asarray(a)
    out = jnp.zeros((rows, cols), dtype)
    return out.at[:a.shape[0], :a.shape[1]].set(a.astype(dtype))


def prepare_params(params, T):
    L = len(params["convs"])
    bf16, f32 = jnp.bfloat16, jnp.float32
    inv_t = 1.0 / float(T)

    prep = {"node_emb": _pad2(params["node_emb"],
                              params["node_emb"].shape[0], HP, f32)}

    we, be, w1, b1, w2, b2, eps = [], [], [], [], [], [], []
    for c in params["convs"]:
        we.append(_pad2(c["We"], KP, HP, bf16))
        be.append(_pad2(c["be"][None, :], 1, HP, f32))
        w1.append(_pad2(c["W1"], HP, H2P, bf16))
        b1.append(_pad2(c["b1"][None, :], 1, H2P, f32))
        w2.append(_pad2(c["W2"], H2P, HP, bf16))
        b2.append(_pad2(c["b2"][None, :], 1, HP, f32))
        eps.append(float(c["eps"]))
    prep["We_all"] = jnp.stack(we)                         # [L, KP, HP]
    prep["be_all"] = jnp.stack(be)                         # [L, 1,  HP]
    prep["W1_all"] = jnp.stack(w1)                         # [L, HP, H2P]
    prep["b1_all"] = jnp.stack(b1)                         # [L, 1,  H2P]
    prep["W2_all"] = jnp.stack(w2)                         # [L, H2P, HP]
    prep["b2_all"] = jnp.stack(b2)                         # [L, 1,  HP]

    alphas = []
    if L > 1:
        vw1, vb1, vw2, vb2 = [], [], [], []
        for m in params["vn_mlps"]:
            vw1.append(_pad2(m["W1"], HP, H2P, bf16))
            vb1.append(_pad2(m["b1"][None, :], 1, H2P, f32))
            vw2.append(_pad2(m["W2"], H2P, HP, bf16))
            vb2.append(_pad2(m["b2"][None, :], 1, HP, f32))
            alphas += [float(m["a1"]), float(m["a2"])]
        prep["vW1_all"] = jnp.stack(vw1)
        prep["vb1_all"] = jnp.stack(vb1)
        prep["vW2_all"] = jnp.stack(vw2)
        prep["vb2_all"] = jnp.stack(vb2)
    else:  # unused dummies (avoid zero-sized arrays)
        prep["vW1_all"] = jnp.zeros((1, HP, H2P), bf16)
        prep["vb1_all"] = jnp.zeros((1, 1, H2P), f32)
        prep["vW2_all"] = jnp.zeros((1, H2P, HP), bf16)
        prep["vb2_all"] = jnp.zeros((1, 1, HP), f32)

    # 1/T folded into the prediction head.
    prep["Wp"] = _pad2(jnp.asarray(params["Wp"]) * inv_t, HP, CP, bf16)
    prep["bp"] = _pad2(jnp.asarray(params["bp"])[None, :] * inv_t, 1, CP, f32)

    prep["scalars"] = jnp.array(eps + alphas, f32)         # SMEM vector
    return prep


# ----------------------------------------------------------------------------
# Full forward pass (eval mode).  Glue = node-emb lookup + lane-dense one-hot
# gather/scatter/pool operators (index padding = -1 -> all-zero rows/cols).
# ----------------------------------------------------------------------------
@functools.partial(jax.jit, static_argnames=("num_graphs", "num_class"))
def virtualnode_net_forward(prep, x_idx, edge_index, edge_attr, batch,
                            num_graphs, num_class):
    f32, bf16, i32 = jnp.float32, jnp.bfloat16, jnp.int32
    N = x_idx.shape[0]
    E = edge_index.shape[1]
    NP = _round_up(max(N, 1), LANE)
    EP = _round_up(max(E, 1), LANE)
    GP = _round_up(max(num_graphs, 1), SUB)    # derived from num_graphs (no silent drop)

    # node_encoder: Embedding(1, hidden) lookup (ogbg-ppa node indices are all 0)
    x_emb = jnp.take(prep["node_emb"], x_idx, axis=0)                 # [N, HP]
    x0 = jnp.zeros((NP, HP), f32).at[:N].set(x_emb)                   # [NP, HP]

    node_ids = jnp.arange(NP, dtype=i32)
    graph_ids = jnp.arange(GP, dtype=i32)
    src_p = jnp.full((EP,), -1, i32).at[:E].set(edge_index[0].astype(i32))
    dst_p = jnp.full((EP,), -1, i32).at[:E].set(edge_index[1].astype(i32))
    batch_p = jnp.full((NP,), -1, i32).at[:N].set(batch.astype(i32))

    # Lane-dense 0/1 operators (exact in bf16), no host-side transpose.
    gsrc = (src_p[:, None] == node_ids[None, :]).astype(bf16)         # [EP, NP]
    sdst = (node_ids[:, None] == dst_p[None, :]).astype(bf16)         # [NP, EP]
    padd = (graph_ids[:, None] == batch_p[None, :]).astype(f32)       # [GP, NP]
    bb = (batch_p[:, None] == graph_ids[None, :]).astype(bf16)        # [NP, GP]
    gsp = jnp.concatenate([gsrc, padd.astype(bf16)], axis=0)          # [EP+GP, NP]

    counts = jnp.maximum(padd.sum(axis=1, keepdims=True), 1.0)
    pmean = (padd / counts).astype(bf16)                              # mean-pool operator

    ea = jnp.zeros((EP, KP), bf16).at[:E, :edge_attr.shape[1]].set(
        edge_attr.astype(bf16))

    out = _fused_call(prep, x0, gsp, sdst, bb, ea, pmean)
    return out[:num_graphs, :num_class]


# ----------------------------------------------------------------------------
# Deterministic parameter init (torch-Linear-style uniform; eval BN folded)
# ----------------------------------------------------------------------------
def init_params(key, hidden, layers, num_edge_feat, num_class, bn_eps=1e-5):
    bn_scale = 1.0 / jnp.sqrt(1.0 + bn_eps)   # eval BN, mean=0 var=1 gamma=1 beta=0

    keys = iter(jax.random.split(key, 8 * layers + 8))

    def dense(k, fan_in, fan_out):
        lim = 1.0 / (fan_in ** 0.5)
        kw, kb = jax.random.split(k)
        W = jax.random.uniform(kw, (fan_in, fan_out), jnp.float32, -lim, lim)
        b = jax.random.uniform(kb, (fan_out,), jnp.float32, -lim, lim)
        return W, b

    params = {"node_emb": jax.random.normal(next(keys), (1, hidden), jnp.float32)}

    convs = []
    for _ in range(layers):
        We, be = dense(next(keys), num_edge_feat, hidden)
        W1, b1 = dense(next(keys), hidden, 2 * hidden)
        W2, b2 = dense(next(keys), 2 * hidden, hidden)
        convs.append(dict(We=We, be=be,
                          W1=W1 * bn_scale, b1=b1 * bn_scale,   # BN(2H) folded
                          W2=W2, b2=b2, eps=0.0))
    params["convs"] = convs

    vns = []
    for _ in range(layers - 1):
        W1, b1 = dense(next(keys), hidden, 2 * hidden)
        W2, b2 = dense(next(keys), 2 * hidden, hidden)
        vns.append(dict(W1=W1 * bn_scale, b1=b1 * bn_scale,     # BN(2H) folded
                        W2=W2 * bn_scale, b2=b2 * bn_scale,     # BN(H)  folded
                        a1=0.25, a2=0.25))                      # PReLU default alpha
    params["vn_mlps"] = vns

    Wp, bp = dense(next(keys), hidden, num_class)
    params["Wp"], params["bp"] = Wp, bp
    return params


# ----------------------------------------------------------------------------
if __name__ == "__main__":
    hidden, layers, num_class = 32, 3, 8
    T = 2.0
    nodes_per_graph, num_graphs, edges_per_graph = 12, 2, 24
    N = nodes_per_graph * num_graphs
    E = edges_per_graph * num_graphs

    key = jax.random.PRNGKey(0)
    kp, ke = jax.random.split(key)
    params = init_params(kp, hidden, layers, num_edge_feat=7, num_class=num_class)
    prep = prepare_params(params, T)

    # Batched graph: two graphs of 12 nodes each, edges kept within each graph.
    eks = jax.random.split(ke, num_graphs + 1)
    src_list, dst_list = [], []
    for g in range(num_graphs):
        ks, kd = jax.random.split(eks[g])
        src_list.append(jax.random.randint(ks, (edges_per_graph,), 0, nodes_per_graph)
                        + g * nodes_per_graph)
        dst_list.append(jax.random.randint(kd, (edges_per_graph,), 0, nodes_per_graph)
                        + g * nodes_per_graph)
    edge_index = jnp.stack([jnp.concatenate(src_list),
                            jnp.concatenate(dst_list)], axis=0).astype(jnp.int32)
    edge_attr = jax.random.uniform(eks[-1], (E, 7), jnp.float32)
    batch = jnp.repeat(jnp.arange(num_graphs, dtype=jnp.int32), nodes_per_graph)
    x_idx = jnp.zeros((N,), jnp.int32)   # ogbg-ppa: single node-embedding index 0

    out = virtualnode_net_forward(prep, x_idx, edge_index, edge_attr, batch,
                                  num_graphs=num_graphs, num_class=num_class)
    jax.block_until_ready(out)
    assert out.shape == (num_graphs, num_class)
    assert bool(jnp.all(jnp.isfinite(out)))
    print("KERNEL_OK")
</pallas_src>

<mosaic_0001>
module attributes {stable_mosaic.version = 11 : i64} {
  func.func @_fused_kernel(%arg0: memref<7xf32, #tpu.memory_space<smem>>, %arg1: memref<128x128xf32, #tpu.memory_space<vmem>>, %arg2: memref<136x128xbf16, #tpu.memory_space<vmem>>, %arg3: memref<128x128xbf16, #tpu.memory_space<vmem>>, %arg4: memref<128x8xbf16, #tpu.memory_space<vmem>>, %arg5: memref<128x128xbf16, #tpu.memory_space<vmem>>, %arg6: memref<3x128x128xbf16, #tpu.memory_space<vmem>>, %arg7: memref<3x1x128xf32, #tpu.memory_space<vmem>>, %arg8: memref<3x128x128xbf16, #tpu.memory_space<vmem>>, %arg9: memref<3x1x128xf32, #tpu.memory_space<vmem>>, %arg10: memref<3x128x128xbf16, #tpu.memory_space<vmem>>, %arg11: memref<3x1x128xf32, #tpu.memory_space<vmem>>, %arg12: memref<2x128x128xbf16, #tpu.memory_space<vmem>>, %arg13: memref<2x1x128xf32, #tpu.memory_space<vmem>>, %arg14: memref<2x128x128xbf16, #tpu.memory_space<vmem>>, %arg15: memref<2x1x128xf32, #tpu.memory_space<vmem>>, %arg16: memref<8x128xbf16, #tpu.memory_space<vmem>>, %arg17: memref<128x128xbf16, #tpu.memory_space<vmem>>, %arg18: memref<1x128xf32, #tpu.memory_space<vmem>>, %arg19: memref<8x128xf32, #tpu.memory_space<vmem>>) attributes {dimension_semantics = [], scalar_prefetch = 0 : i64, scratch_operands = 0 : i64, tpu.core_type = #tpu.core_type<tc>} {
    %c0 = arith.constant 0 : index
    %c0_0 = arith.constant 0 : index
    %0 = vector.load %arg2[%c0, %c0_0] : memref<136x128xbf16, #tpu.memory_space<vmem>>, vector<136x128xbf16>
    %c0_1 = arith.constant 0 : index
    %c0_2 = arith.constant 0 : index
    %1 = vector.load %arg3[%c0_1, %c0_2] : memref<128x128xbf16, #tpu.memory_space<vmem>>, vector<128x128xbf16>
    %c0_3 = arith.constant 0 : index
    %c0_4 = arith.constant 0 : index
    %2 = vector.load %arg4[%c0_3, %c0_4] : memref<128x8xbf16, #tpu.memory_space<vmem>>, vector<128x8xbf16>
    %c0_5 = arith.constant 0 : index
    %c0_6 = arith.constant 0 : index
    %3 = vector.load %arg5[%c0_5, %c0_6] : memref<128x128xbf16, #tpu.memory_space<vmem>>, vector<128x128xbf16>
    %c0_7 = arith.constant 0 : index
    %c0_8 = arith.constant 0 : index
    %4 = vector.load %arg1[%c0_7, %c0_8] : memref<128x128xf32, #tpu.memory_space<vmem>>, vector<128x128xf32>
    %cst = arith.constant 0.000000e+00 : f32
    %5 = vector.broadcast %cst : f32 to vector<8x128xf32>
    %c0_9 = arith.constant 0 : index
    %6 = memref.load %arg0[%c0_9] : memref<7xf32, #tpu.memory_space<smem>>
    %7 = arith.truncf %4 : vector<128x128xf32> to vector<128x128xbf16>
    %cst_10 = arith.constant dense<0.000000e+00> : vector<136x128xf32>
    %8 = tpu.matmul %0, %7, %cst_10 {dimension_numbers = #tpu.dot_dimension_numbers<[1], [0], [0], [1], [0, 0, 1, 1], [], []>} : vector<136x128xbf16>, vector<128x128xbf16>, vector<136x128xf32> -> vector<136x128xf32>
    %9 = vector.extract_strided_slice %8 {offsets = [0, 0], sizes = [128, 128], strides = [1, 1]} : vector<136x128xf32> to vector<128x128xf32>
    %c0_11 = arith.constant 0 : index
    %c0_12 = arith.constant 0 : index
    %c0_13 = arith.constant 0 : index
    %10 = vector.load %arg6[%c0_11, %c0_12, %c0_13] : memref<3x128x128xbf16, #tpu.memory_space<vmem>>, vector<1x128x128xbf16>
    %11 = vector.shape_cast %10 : vector<1x128x128xbf16> to vector<128x128xbf16>
    %cst_14 = arith.constant dense<0.000000e+00> : vector<128x128xf32>
    %12 = tpu.matmul %3, %11, %cst_14 {dimension_numbers = #tpu.dot_dimension_numbers<[1], [0], [0], [1], [0, 0, 1, 1], [], []>} : vector<128x128xbf16>, vector<128x128xbf16>, vector<128x128xf32> -> vector<128x128xf32>
    %c0_15 = arith.constant 0 : index
    %c0_16 = arith.constant 0 : index
    %c0_17 = arith.constant 0 : index
    %13 = vector.load %arg7[%c0_15, %c0_16, %c0_17] : memref<3x1x128xf32, #tpu.memory_space<vmem>>, vector<1x1x128xf32>
    %14 = vector.shape_cast %13 : vector<1x1x128xf32> to vector<1x128xf32>
    %15 = vector.broadcast %14 : vector<1x128xf32> to vector<128x128xf32>
    %16 = arith.addf %12, %15 : vector<128x128xf32>
    %17 = arith.addf %9, %16 : vector<128x128xf32>
    %cst_18 = arith.constant 0.000000e+00 : f32
    %18 = vector.broadcast %cst_18 : f32 to vector<128x128xf32>
    %19 = arith.maximumf %17, %18 : vector<128x128xf32>
    %20 = arith.truncf %19 : vector<128x128xf32> to vector<128x128xbf16>
    %cst_19 = arith.constant dense<0.000000e+00> : vector<128x128xf32>
    %21 = tpu.matmul %1, %20, %cst_19 {dimension_numbers = #tpu.dot_dimension_numbers<[1], [0], [0], [1], [0, 0, 1, 1], [], []>} : vector<128x128xbf16>, vector<128x128xbf16>, vector<128x128xf32> -> vector<128x128xf32>
    %cst_20 = arith.constant 1.000000e+00 : f32
    %22 = arith.addf %cst_20, %6 : f32
    %23 = vector.broadcast %22 : f32 to vector<128x128xf32>
    %24 = arith.mulf %23, %4 : vector<128x128xf32>
    %25 = arith.addf %21, %24 : vector<128x128xf32>
    %c0_21 = arith.constant 0 : index
    %c0_22 = arith.constant 0 : index
    %c0_23 = arith.constant 0 : index
    %26 = vector.load %arg8[%c0_21, %c0_22, %c0_23] : memref<3x128x128xbf16, #tpu.memory_space<vmem>>, vector<1x128x128xbf16>
    %27 = vector.shape_cast %26 : vector<1x128x128xbf16> to vector<128x128xbf16>
    %28 = arith.truncf %25 : vector<128x128xf32> to vector<128x128xbf16>
    %cst_24 = arith.constant dense<0.000000e+00> : vector<128x128xf32>
    %29 = tpu.matmul %28, %27, %cst_24 {dimension_numbers = #tpu.dot_dimension_numbers<[1], [0], [0], [1], [0, 0, 1, 1], [], []>} : vector<128x128xbf16>, vector<128x128xbf16>, vector<128x128xf32> -> vector<128x128xf32>
    %c0_25 = arith.constant 0 : index
    %c0_26 = arith.constant 0 : index
    %c0_27 = arith.constant 0 : index
    %30 = vector.load %arg9[%c0_25, %c0_26, %c0_27] : memref<3x1x128xf32, #tpu.memory_space<vmem>>, vector<1x1x128xf32>
    %31 = vector.shape_cast %30 : vector<1x1x128xf32> to vector<1x128xf32>
    %32 = vector.broadcast %31 : vector<1x128xf32> to vector<128x128xf32>
    %33 = arith.addf %29, %32 : vector<128x128xf32>
    %cst_28 = arith.constant 0.000000e+00 : f32
    %34 = vector.broadcast %cst_28 : f32 to vector<128x128xf32>
    %35 = arith.maximumf %33, %34 : vector<128x128xf32>
    %c0_29 = arith.constant 0 : index
    %c0_30 = arith.constant 0 : index
    %c0_31 = arith.constant 0 : index
    %36 = vector.load %arg10[%c0_29, %c0_30, %c0_31] : memref<3x128x128xbf16, #tpu.memory_space<vmem>>, vector<1x128x128xbf16>
    %37 = vector.shape_cast %36 : vector<1x128x128xbf16> to vector<128x128xbf16>
    %38 = arith.truncf %35 : vector<128x128xf32> to vector<128x128xbf16>
    %cst_32 = arith.constant dense<0.000000e+00> : vector<128x128xf32>
    %39 = tpu.matmul %38, %37, %cst_32 {dimension_numbers = #tpu.dot_dimension_numbers<[1], [0], [0], [1], [0, 0, 1, 1], [], []>} : vector<128x128xbf16>, vector<128x128xbf16>, vector<128x128xf32> -> vector<128x128xf32>
    %c0_33 = arith.constant 0 : index
    %c0_34 = arith.constant 0 : index
    %c0_35 = arith.constant 0 : index
    %40 = vector.load %arg11[%c0_33, %c0_34, %c0_35] : memref<3x1x128xf32, #tpu.memory_space<vmem>>, vector<1x1x128xf32>
    %41 = vector.shape_cast %40 : vector<1x1x128xf32> to vector<1x128xf32>
    %42 = vector.broadcast %41 : vector<1x128xf32> to vector<128x128xf32>
    %43 = arith.addf %39, %42 : vector<128x128xf32>
    %c3 = arith.constant 3 : index
    %44 = memref.load %arg0[%c3] : memref<7xf32, #tpu.memory_space<smem>>
    %c4 = arith.constant 4 : index
    %45 = memref.load %arg0[%c4] : memref<7xf32, #tpu.memory_space<smem>>
    %46 = vector.extract_strided_slice %8 {offsets = [128, 0], sizes = [8, 128], strides = [1, 1]} : vector<136x128xf32> to vector<8x128xf32>
    %47 = arith.addf %46, %5 : vector<8x128xf32>
    %c0_36 = arith.constant 0 : index
    %c0_37 = arith.constant 0 : index
    %c0_38 = arith.constant 0 : index
    %48 = vector.load %arg12[%c0_36, %c0_37, %c0_38] : memref<2x128x128xbf16, #tpu.memory_space<vmem>>, vector<1x128x128xbf16>
    %49 = vector.shape_cast %48 : vector<1x128x128xbf16> to vector<128x128xbf16>
    %50 = arith.truncf %47 : vector<8x128xf32> to vector<8x128xbf16>
    %cst_39 = arith.constant dense<0.000000e+00> : vector<8x128xf32>
    %51 = tpu.matmul %50, %49, %cst_39 {dimension_numbers = #tpu.dot_dimension_numbers<[1], [0], [0], [1], [0, 0, 1, 1], [], []>} : vector<8x128xbf16>, vector<128x128xbf16>, vector<8x128xf32> -> vector<8x128xf32>
    %c0_40 = arith.constant 0 : index
    %c0_41 = arith.constant 0 : index
    %c0_42 = arith.constant 0 : index
    %52 = vector.load %arg13[%c0_40, %c0_41, %c0_42] : memref<2x1x128xf32, #tpu.memory_space<vmem>>, vector<1x1x128xf32>
    %53 = vector.shape_cast %52 : vector<1x1x128xf32> to vector<1x128xf32>
    %54 = vector.broadcast %53 : vector<1x128xf32> to vector<8x128xf32>
    %55 = arith.addf %51, %54 : vector<8x128xf32>
    %cst_43 = arith.constant 0.000000e+00 : f32
    %56 = vector.broadcast %cst_43 : f32 to vector<8x128xf32>
    %57 = arith.cmpf oge, %55, %56 : vector<8x128xf32>
    %58 = vector.broadcast %44 : f32 to vector<8x128xf32>
    %59 = arith.mulf %58, %55 : vector<8x128xf32>
    %60 = arith.select %57, %55, %59 : vector<8x128xi1>, vector<8x128xf32>
    %c0_44 = arith.constant 0 : index
    %c0_45 = arith.constant 0 : index
    %c0_46 = arith.constant 0 : index
    %61 = vector.load %arg14[%c0_44, %c0_45, %c0_46] : memref<2x128x128xbf16, #tpu.memory_space<vmem>>, vector<1x128x128xbf16>
    %62 = vector.shape_cast %61 : vector<1x128x128xbf16> to vector<128x128xbf16>
    %63 = arith.truncf %60 : vector<8x128xf32> to vector<8x128xbf16>
    %cst_47 = arith.constant dense<0.000000e+00> : vector<8x128xf32>
    %64 = tpu.matmul %63, %62, %cst_47 {dimension_numbers = #tpu.dot_dimension_numbers<[1], [0], [0], [1], [0, 0, 1, 1], [], []>} : vector<8x128xbf16>, vector<128x128xbf16>, vector<8x128xf32> -> vector<8x128xf32>
    %c0_48 = arith.constant 0 : index
    %c0_49 = arith.constant 0 : index
    %c0_50 = arith.constant 0 : index
    %65 = vector.load %arg15[%c0_48, %c0_49, %c0_50] : memref<2x1x128xf32, #tpu.memory_space<vmem>>, vector<1x1x128xf32>
    %66 = vector.shape_cast %65 : vector<1x1x128xf32> to vector<1x128xf32>
    %67 = vector.broadcast %66 : vector<1x128xf32> to vector<8x128xf32>
    %68 = arith.addf %64, %67 : vector<8x128xf32>
    %cst_51 = arith.constant 0.000000e+00 : f32
    %69 = vector.broadcast %cst_51 : f32 to vector<8x128xf32>
    %70 = arith.cmpf oge, %68, %69 : vector<8x128xf32>
    %71 = vector.broadcast %45 : f32 to vector<8x128xf32>
    %72 = arith.mulf %71, %68 : vector<8x128xf32>
    %73 = arith.select %70, %68, %72 : vector<8x128xi1>, vector<8x128xf32>
    %c1 = arith.constant 1 : index
    %74 = memref.load %arg0[%c1] : memref<7xf32, #tpu.memory_space<smem>>
    %75 = arith.truncf %73 : vector<8x128xf32> to vector<8x128xbf16>
    %cst_52 = arith.constant dense<0.000000e+00> : vector<128x128xf32>
    %76 = tpu.matmul %2, %75, %cst_52 {dimension_numbers = #tpu.dot_dimension_numbers<[1], [0], [0], [1], [0, 0, 1, 1], [], []>} : vector<128x8xbf16>, vector<8x128xbf16>, vector<128x128xf32> -> vector<128x128xf32>
    %77 = arith.addf %43, %76 : vector<128x128xf32>
    %78 = arith.truncf %77 : vector<128x128xf32> to vector<128x128xbf16>
    %cst_53 = arith.constant dense<0.000000e+00> : vector<136x128xf32>
    %79 = tpu.matmul %0, %78, %cst_53 {dimension_numbers = #tpu.dot_dimension_numbers<[1], [0], [0], [1], [0, 0, 1, 1], [], []>} : vector<136x128xbf16>, vector<128x128xbf16>, vector<136x128xf32> -> vector<136x128xf32>
    %80 = vector.extract_strided_slice %79 {offsets = [0, 0], sizes = [128, 128], strides = [1, 1]} : vector<136x128xf32> to vector<128x128xf32>
    %c1_54 = arith.constant 1 : index
    %c0_55 = arith.constant 0 : index
    %c0_56 = arith.constant 0 : index
    %81 = vector.load %arg6[%c1_54, %c0_55, %c0_56] : memref<3x128x128xbf16, #tpu.memory_space<vmem>>, vector<1x128x128xbf16>
    %82 = vector.shape_cast %81 : vector<1x128x128xbf16> to vector<128x128xbf16>
    %cst_57 = arith.constant dense<0.000000e+00> : vector<128x128xf32>
    %83 = tpu.matmul %3, %82, %cst_57 {dimension_numbers = #tpu.dot_dimension_numbers<[1], [0], [0], [1], [0, 0, 1, 1], [], []>} : vector<128x128xbf16>, vector<128x128xbf16>, vector<128x128xf32> -> vector<128x128xf32>
    %c1_58 = arith.constant 1 : index
    %c0_59 = arith.constant 0 : index
    %c0_60 = arith.constant 0 : index
    %84 = vector.load %arg7[%c1_58, %c0_59, %c0_60] : memref<3x1x128xf32, #tpu.memory_space<vmem>>, vector<1x1x128xf32>
    %85 = vector.shape_cast %84 : vector<1x1x128xf32> to vector<1x128xf32>
    %86 = vector.broadcast %85 : vector<1x128xf32> to vector<128x128xf32>
    %87 = arith.addf %83, %86 : vector<128x128xf32>
    %88 = arith.addf %80, %87 : vector<128x128xf32>
    %cst_61 = arith.constant 0.000000e+00 : f32
    %89 = vector.broadcast %cst_61 : f32 to vector<128x128xf32>
    %90 = arith.maximumf %88, %89 : vector<128x128xf32>
    %91 = arith.truncf %90 : vector<128x128xf32> to vector<128x128xbf16>
    %cst_62 = arith.constant dense<0.000000e+00> : vector<128x128xf32>
    %92 = tpu.matmul %1, %91, %cst_62 {dimension_numbers = #tpu.dot_dimension_numbers<[1], [0], [0], [1], [0, 0, 1, 1], [], []>} : vector<128x128xbf16>, vector<128x128xbf16>, vector<128x128xf32> -> vector<128x128xf32>
    %cst_63 = arith.constant 1.000000e+00 : f32
    %93 = arith.addf %cst_63, %74 : f32
    %94 = vector.broadcast %93 : f32 to vector<128x128xf32>
    %95 = arith.mulf %94, %77 : vector<128x128xf32>
    %96 = arith.addf %92, %95 : vector<128x128xf32>
    %c1_64 = arith.constant 1 : index
    %c0_65 = arith.constant 0 : index
    %c0_66 = arith.constant 0 : index
    %97 = vector.load %arg8[%c1_64, %c0_65, %c0_66] : memref<3x128x128xbf16, #tpu.memory_space<vmem>>, vector<1x128x128xbf16>
    %98 = vector.shape_cast %97 : vector<1x128x128xbf16> to vector<128x128xbf16>
    %99 = arith.truncf %96 : vector<128x128xf32> to vector<128x128xbf16>
    %cst_67 = arith.constant dense<0.000000e+00> : vector<128x128xf32>
    %100 = tpu.matmul %99, %98, %cst_67 {dimension_numbers = #tpu.dot_dimension_numbers<[1], [0], [0], [1], [0, 0, 1, 1], [], []>} : vector<128x128xbf16>, vector<128x128xbf16>, vector<128x128xf32> -> vector<128x128xf32>
    %c1_68 = arith.constant 1 : index
    %c0_69 = arith.constant 0 : index
    %c0_70 = arith.constant 0 : index
    %101 = vector.load %arg9[%c1_68, %c0_69, %c0_70] : memref<3x1x128xf32, #tpu.memory_space<vmem>>, vector<1x1x128xf32>
    %102 = vector.shape_cast %101 : vector<1x1x128xf32> to vector<1x128xf32>
    %103 = vector.broadcast %102 : vector<1x128xf32> to vector<128x128xf32>
    %104 = arith.addf %100, %103 : vector<128x128xf32>
    %cst_71 = arith.constant 0.000000e+00 : f32
    %105 = vector.broadcast %cst_71 : f32 to vector<128x128xf32>
    %106 = arith.maximumf %104, %105 : vector<128x128xf32>
    %c1_72 = arith.constant 1 : index
    %c0_73 = arith.constant 0 : index
    %c0_74 = arith.constant 0 : index
    %107 = vector.load %arg10[%c1_72, %c0_73, %c0_74] : memref<3x128x128xbf16, #tpu.memory_space<vmem>>, vector<1x128x128xbf16>
    %108 = vector.shape_cast %107 : vector<1x128x128xbf16> to vector<128x128xbf16>
    %109 = arith.truncf %106 : vector<128x128xf32> to vector<128x128xbf16>
    %cst_75 = arith.constant dense<0.000000e+00> : vector<128x128xf32>
    %110 = tpu.matmul %109, %108, %cst_75 {dimension_numbers = #tpu.dot_dimension_numbers<[1], [0], [0], [1], [0, 0, 1, 1], [], []>} : vector<128x128xbf16>, vector<128x128xbf16>, vector<128x128xf32> -> vector<128x128xf32>
    %c1_76 = arith.constant 1 : index
    %c0_77 = arith.constant 0 : index
    %c0_78 = arith.constant 0 : index
    %111 = vector.load %arg11[%c1_76, %c0_77, %c0_78] : memref<3x1x128xf32, #tpu.memory_space<vmem>>, vector<1x1x128xf32>
    %112 = vector.shape_cast %111 : vector<1x1x128xf32> to vector<1x128xf32>
    %113 = vector.broadcast %112 : vector<1x128xf32> to vector<128x128xf32>
    %114 = arith.addf %110, %113 : vector<128x128xf32>
    %c5 = arith.constant 5 : index
    %115 = memref.load %arg0[%c5] : memref<7xf32, #tpu.memory_space<smem>>
    %c6 = arith.constant 6 : index
    %116 = memref.load %arg0[%c6] : memref<7xf32, #tpu.memory_space<smem>>
    %117 = vector.extract_strided_slice %79 {offsets = [128, 0], sizes = [8, 128], strides = [1, 1]} : vector<136x128xf32> to vector<8x128xf32>
    %118 = arith.addf %117, %73 : vector<8x128xf32>
    %c1_79 = arith.constant 1 : index
    %c0_80 = arith.constant 0 : index
    %c0_81 = arith.constant 0 : index
    %119 = vector.load %arg12[%c1_79, %c0_80, %c0_81] : memref<2x128x128xbf16, #tpu.memory_space<vmem>>, vector<1x128x128xbf16>
    %120 = vector.shape_cast %119 : vector<1x128x128xbf16> to vector<128x128xbf16>
    %121 = arith.truncf %118 : vector<8x128xf32> to vector<8x128xbf16>
    %cst_82 = arith.constant dense<0.000000e+00> : vector<8x128xf32>
    %122 = tpu.matmul %121, %120, %cst_82 {dimension_numbers = #tpu.dot_dimension_numbers<[1], [0], [0], [1], [0, 0, 1, 1], [], []>} : vector<8x128xbf16>, vector<128x128xbf16>, vector<8x128xf32> -> vector<8x128xf32>
    %c1_83 = arith.constant 1 : index
    %c0_84 = arith.constant 0 : index
    %c0_85 = arith.constant 0 : index
    %123 = vector.load %arg13[%c1_83, %c0_84, %c0_85] : memref<2x1x128xf32, #tpu.memory_space<vmem>>, vector<1x1x128xf32>
    %124 = vector.shape_cast %123 : vector<1x1x128xf32> to vector<1x128xf32>
    %125 = vector.broadcast %124 : vector<1x128xf32> to vector<8x128xf32>
    %126 = arith.addf %122, %125 : vector<8x128xf32>
    %cst_86 = arith.constant 0.000000e+00 : f32
    %127 = vector.broadcast %cst_86 : f32 to vector<8x128xf32>
    %128 = arith.cmpf oge, %126, %127 : vector<8x128xf32>
    %129 = vector.broadcast %115 : f32 to vector<8x128xf32>
    %130 = arith.mulf %129, %126 : vector<8x128xf32>
    %131 = arith.select %128, %126, %130 : vector<8x128xi1>, vector<8x128xf32>
    %c1_87 = arith.constant 1 : index
    %c0_88 = arith.constant 0 : index
    %c0_89 = arith.constant 0 : index
    %132 = vector.load %arg14[%c1_87, %c0_88, %c0_89] : memref<2x128x128xbf16, #tpu.memory_space<vmem>>, vector<1x128x128xbf16>
    %133 = vector.shape_cast %132 : vector<1x128x128xbf16> to vector<128x128xbf16>
    %134 = arith.truncf %131 : vector<8x128xf32> to vector<8x128xbf16>
    %cst_90 = arith.constant dense<0.000000e+00> : vector<8x128xf32>
    %135 = tpu.matmul %134, %133, %cst_90 {dimension_numbers = #tpu.dot_dimension_numbers<[1], [0], [0], [1], [0, 0, 1, 1], [], []>} : vector<8x128xbf16>, vector<128x128xbf16>, vector<8x128xf32> -> vector<8x128xf32>
    %c1_91 = arith.constant 1 : index
    %c0_92 = arith.constant 0 : index
    %c0_93 = arith.constant 0 : index
    %136 = vector.load %arg15[%c1_91, %c0_92, %c0_93] : memref<2x1x128xf32, #tpu.memory_space<vmem>>, vector<1x1x128xf32>
    %137 = vector.shape_cast %136 : vector<1x1x128xf32> to vector<1x128xf32>
    %138 = vector.broadcast %137 : vector<1x128xf32> to vector<8x128xf32>
    %139 = arith.addf %135, %138 : vector<8x128xf32>
    %cst_94 = arith.constant 0.000000e+00 : f32
    %140 = vector.broadcast %cst_94 : f32 to vector<8x128xf32>
    %141 = arith.cmpf oge, %139, %140 : vector<8x128xf32>
    %142 = vector.broadcast %116 : f32 to vector<8x128xf32>
    %143 = arith.mulf %142, %139 : vector<8x128xf32>
    %144 = arith.select %141, %139, %143 : vector<8x128xi1>, vector<8x128xf32>
    %c2 = arith.constant 2 : index
    %145 = memref.load %arg0[%c2] : memref<7xf32, #tpu.memory_space<smem>>
    %146 = arith.truncf %144 : vector<8x128xf32> to vector<8x128xbf16>
    %cst_95 = arith.constant dense<0.000000e+00> : vector<128x128xf32>
    %147 = tpu.matmul %2, %146, %cst_95 {dimension_numbers = #tpu.dot_dimension_numbers<[1], [0], [0], [1], [0, 0, 1, 1], [], []>} : vector<128x8xbf16>, vector<8x128xbf16>, vector<128x128xf32> -> vector<128x128xf32>
    %148 = arith.addf %114, %147 : vector<128x128xf32>
    %149 = arith.truncf %148 : vector<128x128xf32> to vector<128x128xbf16>
    %cst_96 = arith.constant dense<0.000000e+00> : vector<136x128xf32>
    %150 = tpu.matmul %0, %149, %cst_96 {dimension_numbers = #tpu.dot_dimension_numbers<[1], [0], [0], [1], [0, 0, 1, 1], [], []>} : vector<136x128xbf16>, vector<128x128xbf16>, vector<136x128xf32> -> vector<136x128xf32>
    %151 = vector.extract_strided_slice %150 {offsets = [0, 0], sizes = [128, 128], strides = [1, 1]} : vector<136x128xf32> to vector<128x128xf32>
    %c2_97 = arith.constant 2 : index
    %c0_98 = arith.constant 0 : index
    %c0_99 = arith.constant 0 : index
    %152 = vector.load %arg6[%c2_97, %c0_98, %c0_99] : memref<3x128x128xbf16, #tpu.memory_space<vmem>>, vector<1x128x128xbf16>
    %153 = vector.shape_cast %152 : vector<1x128x128xbf16> to vector<128x128xbf16>
    %cst_100 = arith.constant dense<0.000000e+00> : vector<128x128xf32>
    %154 = tpu.matmul %3, %153, %cst_100 {dimension_numbers = #tpu.dot_dimension_numbers<[1], [0], [0], [1], [0, 0, 1, 1], [], []>} : vector<128x128xbf16>, vector<128x128xbf16>, vector<128x128xf32> -> vector<128x128xf32>
    %c2_101 = arith.constant 2 : index
    %c0_102 = arith.constant 0 : index
    %c0_103 = arith.constant 0 : index
    %155 = vector.load %arg7[%c2_101, %c0_102, %c0_103] : memref<3x1x128xf32, #tpu.memory_space<vmem>>, vector<1x1x128xf32>
    %156 = vector.shape_cast %155 : vector<1x1x128xf32> to vector<1x128xf32>
    %157 = vector.broadcast %156 : vector<1x128xf32> to vector<128x128xf32>
    %158 = arith.addf %154, %157 : vector<128x128xf32>
    %159 = arith.addf %151, %158 : vector<128x128xf32>
    %cst_104 = arith.constant 0.000000e+00 : f32
    %160 = vector.broadcast %cst_104 : f32 to vector<128x128xf32>
    %161 = arith.maximumf %159, %160 : vector<128x128xf32>
    %162 = arith.truncf %161 : vector<128x128xf32> to vector<128x128xbf16>
    %cst_105 = arith.constant dense<0.000000e+00> : vector<128x128xf32>
    %163 = tpu.matmul %1, %162, %cst_105 {dimension_numbers = #tpu.dot_dimension_numbers<[1], [0], [0], [1], [0, 0, 1, 1], [], []>} : vector<128x128xbf16>, vector<128x128xbf16>, vector<128x128xf32> -> vector<128x128xf32>
    %cst_106 = arith.constant 1.000000e+00 : f32
    %164 = arith.addf %cst_106, %145 : f32
    %165 = vector.broadcast %164 : f32 to vector<128x128xf32>
    %166 = arith.mulf %165, %148 : vector<128x128xf32>
    %167 = arith.addf %163, %166 : vector<128x128xf32>
    %c2_107 = arith.constant 2 : index
    %c0_108 = arith.constant 0 : index
    %c0_109 = arith.constant 0 : index
    %168 = vector.load %arg8[%c2_107, %c0_108, %c0_109] : memref<3x128x128xbf16, #tpu.memory_space<vmem>>, vector<1x128x128xbf16>
    %169 = vector.shape_cast %168 : vector<1x128x128xbf16> to vector<128x128xbf16>
    %170 = arith.truncf %167 : vector<128x128xf32> to vector<128x128xbf16>
    %cst_110 = arith.constant dense<0.000000e+00> : vector<128x128xf32>
    %171 = tpu.matmul %170, %169, %cst_110 {dimension_numbers = #tpu.dot_dimension_numbers<[1], [0], [0], [1], [0, 0, 1, 1], [], []>} : vector<128x128xbf16>, vector<128x128xbf16>, vector<128x128xf32> -> vector<128x128xf32>
    %c2_111 = arith.constant 2 : index
    %c0_112 = arith.constant 0 : index
    %c0_113 = arith.constant 0 : index
    %172 = vector.load %arg9[%c2_111, %c0_112, %c0_113] : memref<3x1x128xf32, #tpu.memory_space<vmem>>, vector<1x1x128xf32>
    %173 = vector.shape_cast %172 : vector<1x1x128xf32> to vector<1x128xf32>
    %174 = vector.broadcast %173 : vector<1x128xf32> to vector<128x128xf32>
    %175 = arith.addf %171, %174 : vector<128x128xf32>
    %cst_114 = arith.constant 0.000000e+00 : f32
    %176 = vector.broadcast %cst_114 : f32 to vector<128x128xf32>
    %177 = arith.maximumf %175, %176 : vector<128x128xf32>
    %c2_115 = arith.constant 2 : index
    %c0_116 = arith.constant 0 : index
    %c0_117 = arith.constant 0 : index
    %178 = vector.load %arg10[%c2_115, %c0_116, %c0_117] : memref<3x128x128xbf16, #tpu.memory_space<vmem>>, vector<1x128x128xbf16>
    %179 = vector.shape_cast %178 : vector<1x128x128xbf16> to vector<128x128xbf16>
    %180 = arith.truncf %177 : vector<128x128xf32> to vector<128x128xbf16>
    %cst_118 = arith.constant dense<0.000000e+00> : vector<128x128xf32>
    %181 = tpu.matmul %180, %179, %cst_118 {dimension_numbers = #tpu.dot_dimension_numbers<[1], [0], [0], [1], [0, 0, 1, 1], [], []>} : vector<128x128xbf16>, vector<128x128xbf16>, vector<128x128xf32> -> vector<128x128xf32>
    %c2_119 = arith.constant 2 : index
    %c0_120 = arith.constant 0 : index
    %c0_121 = arith.constant 0 : index
    %182 = vector.load %arg11[%c2_119, %c0_120, %c0_121] : memref<3x1x128xf32, #tpu.memory_space<vmem>>, vector<1x1x128xf32>
    %183 = vector.shape_cast %182 : vector<1x1x128xf32> to vector<1x128xf32>
    %184 = vector.broadcast %183 : vector<1x128xf32> to vector<128x128xf32>
    %185 = arith.addf %181, %184 : vector<128x128xf32>
    %c0_122 = arith.constant 0 : index
    %c0_123 = arith.constant 0 : index
    %186 = vector.load %arg16[%c0_122, %c0_123] : memref<8x128xbf16, #tpu.memory_space<vmem>>, vector<8x128xbf16>
    %187 = arith.truncf %185 : vector<128x128xf32> to vector<128x128xbf16>
    %cst_124 = arith.constant dense<0.000000e+00> : vector<8x128xf32>
    %188 = tpu.matmul %186, %187, %cst_124 {dimension_numbers = #tpu.dot_dimension_numbers<[1], [0], [0], [1], [0, 0, 1, 1], [], []>} : vector<8x128xbf16>, vector<128x128xbf16>, vector<8x128xf32> -> vector<8x128xf32>
    %c0_125 = arith.constant 0 : index
    %c0_126 = arith.constant 0 : index
    %189 = vector.load %arg17[%c0_125, %c0_126] : memref<128x128xbf16, #tpu.memory_space<vmem>>, vector<128x128xbf16>
    %190 = arith.truncf %188 : vector<8x128xf32> to vector<8x128xbf16>
    %cst_127 = arith.constant dense<0.000000e+00> : vector<8x128xf32>
    %191 = tpu.matmul %190, %189, %cst_127 {dimension_numbers = #tpu.dot_dimension_numbers<[1], [0], [0], [1], [0, 0, 1, 1], [], []>} : vector<8x128xbf16>, vector<128x128xbf16>, vector<8x128xf32> -> vector<8x128xf32>
    %c0_128 = arith.constant 0 : index
    %c0_129 = arith.constant 0 : index
    %192 = vector.load %arg18[%c0_128, %c0_129] : memref<1x128xf32, #tpu.memory_space<vmem>>, vector<1x128xf32>
    %193 = vector.broadcast %192 : vector<1x128xf32> to vector<8x128xf32>
    %194 = arith.addf %191, %193 : vector<8x128xf32>
    %c0_130 = arith.constant 0 : index
    %c0_131 = arith.constant 0 : index
    %195 = vector.load %arg19[%c0_130, %c0_131] : memref<8x128xf32, #tpu.memory_space<vmem>>, vector<8x128xf32>
    tpu.vector_store %arg19[%c0_130, %c0_131], %194 {strides = array<i32>} : memref<8x128xf32, #tpu.memory_space<vmem>>, vector<8x128xf32>,
    return
  }
}

</mosaic_0001>

<llo_original>
// kernel: virtualnode_net_forward.1
$region0: #{virtualnode_net_forward.1}
  #allocation0 [shape = 'u32[]', space=smem, size = 0x4, offset = 0x4, fixed_abs, tag = 'smem constant byte address 0x4 - core index']
  #allocation1 [shape = 'u32[72,128]{1,0:T(1,128)}', space=vmem, size = 0x9000, scoped, tag = 'internal scratch']
  %s0 = inlined_call_operand.vmem [shape: f32[7], index: 0, kind: input, shape index: {}]
  %s1 = inlined_call_operand.vmem [shape: f32[128,128], index: 1, kind: input, shape index: {}]
  %s2 = inlined_call_operand.vmem [shape: bf16[136,128], index: 2, kind: input, shape index: {}]
  %s3 = inlined_call_operand.vmem [shape: bf16[128,128], index: 3, kind: input, shape index: {}]
  %s4 = inlined_call_operand.vmem [shape: bf16[128,8], index: 4, kind: input, shape index: {}]
  %s5 = inlined_call_operand.vmem [shape: bf16[128,128], index: 5, kind: input, shape index: {}]
  %s6 = inlined_call_operand.vmem [shape: bf16[3,128,128], index: 6, kind: input, shape index: {}]
  %s7 = inlined_call_operand.vmem [shape: f32[3,1,128], index: 7, kind: input, shape index: {}]
  %s8 = inlined_call_operand.vmem [shape: bf16[3,128,128], index: 8, kind: input, shape index: {}]
  %s9 = inlined_call_operand.vmem [shape: f32[3,1,128], index: 9, kind: input, shape index: {}]
  %s10 = inlined_call_operand.vmem [shape: bf16[3,128,128], index: 10, kind: input, shape index: {}]
  %s11 = inlined_call_operand.vmem [shape: f32[3,1,128], index: 11, kind: input, shape index: {}]
  %s12 = inlined_call_operand.hbm [shape: bf16[2,128,128], index: 12, kind: input, shape index: {}]
  %s13 = inlined_call_operand.vmem [shape: f32[2,1,128], index: 13, kind: input, shape index: {}]
  %s14 = inlined_call_operand.hbm [shape: bf16[2,128,128], index: 14, kind: input, shape index: {}]
  %s15 = inlined_call_operand.vmem [shape: f32[2,1,128], index: 15, kind: input, shape index: {}]
  %s16 = inlined_call_operand.vmem [shape: bf16[8,128], index: 16, kind: input, shape index: {}]
  %s17 = inlined_call_operand.vmem [shape: bf16[128,128], index: 17, kind: input, shape index: {}]
  %s18 = inlined_call_operand.vmem [shape: f32[1,128], index: 18, kind: input, shape index: {}]
  %s19 = inlined_call_operand.vmem [shape: f32[8,128], index: 19, kind: output, shape index: {}]
  %s20 = sld [smem:[#allocation0]]
  $region98: #{virtualnode_net_forward.1} parent=0
    _
  %s22 = ssub.s32 1, %s20
  %s23 = scalar_select 0, %s22, %s20
  $region1: #{virtualnode_net_forward.1} parent=0
    #allocation2 [shape = 'u8[512]{0}', space=smem, size = 0x200, scoped, tag = 'input window, operand 0, single buffered']
    #allocation3 [shape = 's32[1]{0}', space=sflag, size = 0x4, scoped, tag = 'scoped memory for virtualnode_net_forward.1']
    #allocation4 [shape = 's32[1]{0}', space=sflag, size = 0x4, scoped, tag = 'scoped memory for virtualnode_net_forward.1']
    #allocation5 [shape = 'u8[65536]{0}', space=vmem, size = 0x10000, scoped, tag = 'input window, operand 12, single buffered']
    #allocation6 [shape = 'u8[65536]{0}', space=vmem, size = 0x10000, scoped, tag = 'input window, operand 14, single buffered']
    #allocation7 [shape = 's32[1]{0}', space=sflag, size = 0x4, scoped, tag = 'scoped memory for virtualnode_net_forward.1']
    %24 = vsyncpa [#allocation4], 0
    %25 = vsyncpa [#allocation3], 0
    %26 = vsyncpa [#allocation7], 0
    // Predicated region
    $region2: #{virtualnode_net_forward.1} parent=1 // pred_check
      _
    $region3: #{virtualnode_net_forward.1} parent=1 // pred_check_branch
      %28 = sbr.rel (0) target = $region5
    $region4: #{virtualnode_net_forward.1} parent=1 // pred_region
      %30 = vsyncadd [#allocation4], 0
      %s32 = sshll.u32 %s0, 4
      %s33 = int_to_ptr.vmem [resolvable:$true] %s32
      %35 = dma.vmem_to_smem %s33, 16, [#allocation2], [#allocation4]
    $region5: #{virtualnode_net_forward.1} parent=1 // pred_fallthru
      _
    // Predicated region
    $region6: #{virtualnode_net_forward.1} parent=1 // pred_check
      _
    $region7: #{virtualnode_net_forward.1} parent=1 // pred_check_branch
      %37 = sbr.rel (0) target = $region9
    $region8: #{virtualnode_net_forward.1} parent=1 // pred_region
      _
    $region9: #{virtualnode_net_forward.1} parent=1 // pred_fallthru
      _
    // Predicated region
    $region10: #{virtualnode_net_forward.1} parent=1 // pred_check
      _
    $region11: #{virtualnode_net_forward.1} parent=1 // pred_check_branch
      %39 = sbr.rel (0) target = $region13
    $region12: #{virtualnode_net_forward.1} parent=1 // pred_region
      _
    $region13: #{virtualnode_net_forward.1} parent=1 // pred_fallthru
      _
    // Predicated region
    $region14: #{virtualnode_net_forward.1} parent=1 // pred_check
      _
    $region15: #{virtualnode_net_forward.1} parent=1 // pred_check_branch
      %41 = sbr.rel (0) target = $region17
    $region16: #{virtualnode_net_forward.1} parent=1 // pred_region
      _
    $region17: #{virtualnode_net_forward.1} parent=1 // pred_fallthru
      _
    // Predicated region
    $region18: #{virtualnode_net_forward.1} parent=1 // pred_check
      _
    $region19: #{virtualnode_net_forward.1} parent=1 // pred_check_branch
      %43 = sbr.rel (0) target = $region21
    $region20: #{virtualnode_net_forward.1} parent=1 // pred_region
      _
    $region21: #{virtualnode_net_forward.1} parent=1 // pred_fallthru
      _
    // Predicated region
    $region22: #{virtualnode_net_forward.1} parent=1 // pred_check
      _
    $region23: #{virtualnode_net_forward.1} parent=1 // pred_check_branch
      %45 = sbr.rel (0) target = $region25
    $region24: #{virtualnode_net_forward.1} parent=1 // pred_region
      _
    $region25: #{virtualnode_net_forward.1} parent=1 // pred_fallthru
      _
    // Predicated region
    $region26: #{virtualnode_net_forward.1} parent=1 // pred_check
      _
    $region27: #{virtualnode_net_forward.1} parent=1 // pred_check_branch
      %47 = sbr.rel (0) target = $region29
    $region28: #{virtualnode_net_forward.1} parent=1 // pred_region
      _
    $region29: #{virtualnode_net_forward.1} parent=1 // pred_fallthru
      _
    // Predicated region
    $region30: #{virtualnode_net_forward.1} parent=1 // pred_check
      _
    $region31: #{virtualnode_net_forward.1} parent=1 // pred_check_branch
      %49 = sbr.rel (0) target = $region33
    $region32: #{virtualnode_net_forward.1} parent=1 // pred_region
      _
    $region33: #{virtualnode_net_forward.1} parent=1 // pred_fallthru
      _
    // Predicated region
    $region34: #{virtualnode_net_forward.1} parent=1 // pred_check
      _
    $region35: #{virtualnode_net_forward.1} parent=1 // pred_check_branch
      %51 = sbr.rel (0) target = $region37
    $region36: #{virtualnode_net_forward.1} parent=1 // pred_region
      _
    $region37: #{virtualnode_net_forward.1} parent=1 // pred_fallthru
      _
    // Predicated region
    $region38: #{virtualnode_net_forward.1} parent=1 // pred_check
      _
    $region39: #{virtualnode_net_forward.1} parent=1 // pred_check_branch
      %53 = sbr.rel (0) target = $region41
    $region40: #{virtualnode_net_forward.1} parent=1 // pred_region
      _
    $region41: #{virtualnode_net_forward.1} parent=1 // pred_fallthru
      _
    // Predicated region
    $region42: #{virtualnode_net_forward.1} parent=1 // pred_check
      _
    $region43: #{virtualnode_net_forward.1} parent=1 // pred_check_branch
      %55 = sbr.rel (0) target = $region45
    $region44: #{virtualnode_net_forward.1} parent=1 // pred_region
      _
    $region45: #{virtualnode_net_forward.1} parent=1 // pred_fallthru
      _
    // Predicated region
    $region46: #{virtualnode_net_forward.1} parent=1 // pred_check
      _
    $region47: #{virtualnode_net_forward.1} parent=1 // pred_check_branch
      %57 = sbr.rel (0) target = $region49
    $region48: #{virtualnode_net_forward.1} parent=1 // pred_region
      _
    $region49: #{virtualnode_net_forward.1} parent=1 // pred_fallthru
      _
    // Predicated region
    $region50: #{virtualnode_net_forward.1} parent=1 // pred_check
      _
    $region51: #{virtualnode_net_forward.1} parent=1 // pred_check_branch
      %59 = sbr.rel (0) target = $region53
    $region52: #{virtualnode_net_forward.1} parent=1 // pred_region
      %61 = vsyncadd [#allocation3], 0
      %s62 = sshll.u32 %s12, 4
      %s63 = int_to_ptr.hbm [resolvable:$true] %s62
      %s64 = sshll.u32 [#allocation5], 4
      %s65 = int_to_ptr.vmem [resolvable:$true] %s64
      %70 = dma.hbm_to_vmem [thread:$0]  %s63, 2048, %s65, [#allocation3], 64, 64, 4
    $region53: #{virtualnode_net_forward.1} parent=1 // pred_fallthru
      _
    // Predicated region
    $region54: #{virtualnode_net_forward.1} parent=1 // pred_check
      _
    $region55: #{virtualnode_net_forward.1} parent=1 // pred_check_branch
      %72 = sbr.rel (0) target = $region57
    $region56: #{virtualnode_net_forward.1} parent=1 // pred_region
      _
    $region57: #{virtualnode_net_forward.1} parent=1 // pred_fallthru
      _
    // Predicated region
    $region58: #{virtualnode_net_forward.1} parent=1 // pred_check
      _
    $region59: #{virtualnode_net_forward.1} parent=1 // pred_check_branch
      %74 = sbr.rel (0) target = $region61
    $region60: #{virtualnode_net_forward.1} parent=1 // pred_region
      %76 = vsyncadd [#allocation7], 0
      %s77 = sshll.u32 %s14, 4
      %s78 = int_to_ptr.hbm [resolvable:$true] %s77
      %s79 = sshll.u32 [#allocation6], 4
      %s80 = int_to_ptr.vmem [resolvable:$true] %s79
      %85 = dma.hbm_to_vmem [thread:$0]  %s78, 2048, %s80, [#allocation7], 64, 64, 4
    $region61: #{virtualnode_net_forward.1} parent=1 // pred_fallthru
      _
    // Predicated region
    $region62: #{virtualnode_net_forward.1} parent=1 // pred_check
      _
    $region63: #{virtualnode_net_forward.1} parent=1 // pred_check_branch
      %87 = sbr.rel (0) target = $region65
    $region64: #{virtualnode_net_forward.1} parent=1 // pred_region
      _
    $region65: #{virtualnode_net_forward.1} parent=1 // pred_fallthru
      _
    // Predicated region
    $region66: #{virtualnode_net_forward.1} parent=1 // pred_check
      _
    $region67: #{virtualnode_net_forward.1} parent=1 // pred_check_branch
      %89 = sbr.rel (0) target = $region69
    $region68: #{virtualnode_net_forward.1} parent=1 // pred_region
      _
    $region69: #{virtualnode_net_forward.1} parent=1 // pred_fallthru
      _
    // Predicated region
    $region70: #{virtualnode_net_forward.1} parent=1 // pred_check
      _
    $region71: #{virtualnode_net_forward.1} parent=1 // pred_check_branch
      %91 = sbr.rel (0) target = $region73
    $region72: #{virtualnode_net_forward.1} parent=1 // pred_region
      _
    $region73: #{virtualnode_net_forward.1} parent=1 // pred_fallthru
      _
    // Predicated region
    $region74: #{virtualnode_net_forward.1} parent=1 // pred_check
      _
    $region75: #{virtualnode_net_forward.1} parent=1 // pred_check_branch
      %93 = sbr.rel (0) target = $region77
    $region76: #{virtualnode_net_forward.1} parent=1 // pred_region
      _
    $region77: #{virtualnode_net_forward.1} parent=1 // pred_fallthru
      _
    // Predicated region
    $region78: #{virtualnode_net_forward.1} parent=1 // pred_check
      _
    $region79: #{virtualnode_net_forward.1} parent=1 // pred_check_branch
      %95 = sbr.rel (0) target = $region81
    $region80: #{virtualnode_net_forward.1} parent=1 // pred_region
      %97 = dma.done [#allocation4], 16
    $region81: #{virtualnode_net_forward.1} parent=1 // pred_fallthru
      _
    // Predicated region
    $region82: #{virtualnode_net_forward.1} parent=1 // pred_check
      _
    $region83: #{virtualnode_net_forward.1} parent=1 // pred_check_branch
      %99 = sbr.rel (0) target = $region85
    $region84: #{virtualnode_net_forward.1} parent=1 // pred_region
      %101 = dma.done [#allocation3], 2048
    $region85: #{virtualnode_net_forward.1} parent=1 // pred_fallthru
      _
    // Predicated region
    $region86: #{virtualnode_net_forward.1} parent=1 // pred_check
      _
    $region87: #{virtualnode_net_forward.1} parent=1 // pred_check_branch
      %103 = sbr.rel (0) target = $region89
    $region88: #{virtualnode_net_forward.1} parent=1 // pred_region
      %105 = dma.done [#allocation7], 2048
    $region89: #{virtualnode_net_forward.1} parent=1 // pred_fallthru
      _
    %106 = sfence
    %v108 = vld [vmem:[%s2] sm:$0xf]
    %v109 = vld [vmem:[%s2 + $0x4] sm:$0xf]
    %v110 = vld [vmem:[%s2 + $0x8] sm:$0xf]
    %v111 = vld [vmem:[%s2 + $0xc] sm:$0xf]
    %v112 = vld [vmem:[%s2 + $0x10] sm:$0xf]
    %v113 = vld [vmem:[%s2 + $0x14] sm:$0xf]
    %v114 = vld [vmem:[%s2 + $0x18] sm:$0xf]
    %v115 = vld [vmem:[%s2 + $0x1c] sm:$0xf]
    %v116 = vld [vmem:[%s2 + $0x20] sm:$0xf]
    %v117 = vld [vmem:[%s2 + $0x24] sm:$0xf]
    %v118 = vld [vmem:[%s2 + $0x28] sm:$0xf]
    %v119 = vld [vmem:[%s2 + $0x2c] sm:$0xf]
    %v120 = vld [vmem:[%s2 + $0x30] sm:$0xf]
    %v121 = vld [vmem:[%s2 + $0x34] sm:$0xf]
    %v122 = vld [vmem:[%s2 + $0x38] sm:$0xf]
    %v123 = vld [vmem:[%s2 + $0x3c] sm:$0xf]
    %v124 = vld [vmem:[%s2 + $0x40] sm:$0xf]
    %v125 = vld [vmem:[%s3] sm:$0xf]
    %v126 = vld [vmem:[%s3 + $0x4] sm:$0xf]
    %v127 = vld [vmem:[%s3 + $0x8] sm:$0xf]
    %v128 = vld [vmem:[%s3 + $0xc] sm:$0xf]
    %v129 = vld [vmem:[%s3 + $0x10] sm:$0xf]
    %v130 = vld [vmem:[%s3 + $0x14] sm:$0xf]
    %v131 = vld [vmem:[%s3 + $0x18] sm:$0xf]
    %v132 = vld [vmem:[%s3 + $0x1c] sm:$0xf]
    %v133 = vld [vmem:[%s3 + $0x20] sm:$0xf]
    %v134 = vld [vmem:[%s3 + $0x24] sm:$0xf]
    %v135 = vld [vmem:[%s3 + $0x28] sm:$0xf]
    %v136 = vld [vmem:[%s3 + $0x2c] sm:$0xf]
    %v137 = vld [vmem:[%s3 + $0x30] sm:$0xf]
    %v138 = vld [vmem:[%s3 + $0x34] sm:$0xf]
    %v139 = vld [vmem:[%s3 + $0x38] sm:$0xf]
    %v140 = vld [vmem:[%s3 + $0x3c] sm:$0xf]
    %v141 = vld [vmem:[%s4] sm:$0xf]
    %v142 = vld [vmem:[%s4 + $0x4] sm:$0xf]
    %v143 = vld [vmem:[%s4 + $0x8] sm:$0xf]
    %v144 = vld [vmem:[%s4 + $0xc] sm:$0xf]
    %v145 = vld [vmem:[%s4 + $0x10] sm:$0xf]
    %v146 = vld [vmem:[%s4 + $0x14] sm:$0xf]
    %v147 = vld [vmem:[%s4 + $0x18] sm:$0xf]
    %v148 = vld [vmem:[%s4 + $0x1c] sm:$0xf]
    %v149 = vld [vmem:[%s4 + $0x20] sm:$0xf]
    %v150 = vld [vmem:[%s4 + $0x24] sm:$0xf]
    %v151 = vld [vmem:[%s4 + $0x28] sm:$0xf]
    %v152 = vld [vmem:[%s4 + $0x2c] sm:$0xf]
    %v153 = vld [vmem:[%s4 + $0x30] sm:$0xf]
    %v154 = vld [vmem:[%s4 + $0x34] sm:$0xf]
    %v155 = vld [vmem:[%s4 + $0x38] sm:$0xf]
    %v156 = vld [vmem:[%s4 + $0x3c] sm:$0xf]
    %v157 = vld [vmem:[%s5] sm:$0xf]
    %v158 = vld [vmem:[%s5 + $0x4] sm:$0xf]
    %v159 = vld [vmem:[%s5 + $0x8] sm:$0xf]
    %v160 = vld [vmem:[%s5 + $0xc] sm:$0xf]
    %v161 = vld [vmem:[%s5 + $0x10] sm:$0xf]
    %v162 = vld [vmem:[%s5 + $0x14] sm:$0xf]
    %v163 = vld [vmem:[%s5 + $0x18] sm:$0xf]
    %v164 = vld [vmem:[%s5 + $0x1c] sm:$0xf]
    %v165 = vld [vmem:[%s5 + $0x20] sm:$0xf]
    %v166 = vld [vmem:[%s5 + $0x24] sm:$0xf]
    %v167 = vld [vmem:[%s5 + $0x28] sm:$0xf]
    %v168 = vld [vmem:[%s5 + $0x2c] sm:$0xf]
    %v169 = vld [vmem:[%s5 + $0x30] sm:$0xf]
    %v170 = vld [vmem:[%s5 + $0x34] sm:$0xf]
    %v171 = vld [vmem:[%s5 + $0x38] sm:$0xf]
    %v172 = vld [vmem:[%s5 + $0x3c] sm:$0xf]
    %v173 = vld [vmem:[%s1] sm:$0xff]
    %v174 = vld [vmem:[%s1 + $0x8] sm:$0xff]
    %v175 = vld [vmem:[%s1 + $0x10] sm:$0xff]
    %v176 = vld [vmem:[%s1 + $0x18] sm:$0xff]
    %v177 = vld [vmem:[%s1 + $0x20] sm:$0xff]
    %v178 = vld [vmem:[%s1 + $0x28] sm:$0xff]
    %v179 = vld [vmem:[%s1 + $0x30] sm:$0xff]
    %v180 = vld [vmem:[%s1 + $0x38] sm:$0xff]
    %v181 = vld [vmem:[%s1 + $0x40] sm:$0xff]
    %v182 = vld [vmem:[%s1 + $0x48] sm:$0xff]
    %v183 = vld [vmem:[%s1 + $0x50] sm:$0xff]
    %v184 = vld [vmem:[%s1 + $0x58] sm:$0xff]
    %v185 = vld [vmem:[%s1 + $0x60] sm:$0xff]
    %v186 = vld [vmem:[%s1 + $0x68] sm:$0xff]
    %v187 = vld [vmem:[%s1 + $0x70] sm:$0xff]
    %v188 = vld [vmem:[%s1 + $0x78] sm:$0xff]
    %s189 = sld [smem:[#allocation2]]
    %v190 = vpack.c.bf16 %v174, %v173
    %v191 = vpack.c.bf16 %v176, %v175
    %v192 = vpack.c.bf16 %v178, %v177
    %v193 = vpack.c.bf16 %v180, %v179
    %v194 = vpack.c.bf16 %v182, %v181
    %v195 = vpack.c.bf16 %v184, %v183
    %v196 = vpack.c.bf16 %v186, %v185
    %v197 = vpack.c.bf16 %v188, %v187
    %v215 = vunpack.c.l.b16 %v108
    %v216 = vunpack.c.l.b16 %v109
    %v217 = vunpack.c.l.b16 %v110
    %v218 = vunpack.c.l.b16 %v111
    %v219 = vunpack.c.l.b16 %v112
    %v220 = vunpack.c.l.b16 %v113
    %v221 = vunpack.c.l.b16 %v114
    %v222 = vunpack.c.l.b16 %v115
    %v223 = vunpack.c.l.b16 %v116
    %v224 = vunpack.c.l.b16 %v117
    %v225 = vunpack.c.l.b16 %v118
    %v226 = vunpack.c.l.b16 %v119
    %v227 = vunpack.c.l.b16 %v120
    %v228 = vunpack.c.l.b16 %v121
    %v229 = vunpack.c.l.b16 %v122
    %v230 = vunpack.c.l.b16 %v123
    %v231 = vunpack.c.l.b16 %v124
    %v232 = vpack.c.b16 %v216, %v215
    %v233 = vpack.c.b16 %v218, %v217
    %v234 = vpack.c.b16 %v220, %v219
    %v235 = vpack.c.b16 %v222, %v221
    %v236 = vpack.c.b16 %v224, %v223
    %v237 = vpack.c.b16 %v226, %v225
    %v238 = vpack.c.b16 %v228, %v227
    %v239 = vpack.c.b16 %v230, %v229
    %v240 = vpack.c.b16 %v231, %v231
    %250 = vmatpush.bf16.msra.mxu0 %v197
    %251 = vmatpush.bf16.msra.mxu0 %v196
    %252 = vmatpush.bf16.msra.mxu0 %v195
    %253 = vmatpush.bf16.msra.mxu0 %v194
    %254 = vmatpush.bf16.msra.mxu0 %v193
    %255 = vmatpush.bf16.msra.mxu0 %v192
    %256 = vmatpush.bf16.msra.mxu0 %v191
    %257 = vmatpush.bf16.msra.mxu0 %v190
    %258 = vmatmul.bf16.gmra.mxu0 %v232
    %v259 = vpop.f32.mrf.mxu0
    %v260 = vadd.f32 0.0, %v259
    %v261 = vpop.f32.mrf.mxu0
    %v262 = vadd.f32 0.0, %v261
    %263 = vmatmul.bf16.gmra.mxu0 %v233
    %v264 = vpop.f32.mrf.mxu0
    %v265 = vadd.f32 0.0, %v264
    %v266 = vpop.f32.mrf.mxu0
    %v267 = vadd.f32 0.0, %v266
    %268 = vmatmul.bf16.gmra.mxu0 %v234
    %v269 = vpop.f32.mrf.mxu0
    %v270 = vadd.f32 0.0, %v269
    %v271 = vpop.f32.mrf.mxu0
    %v272 = vadd.f32 0.0, %v271
    %273 = vmatmul.bf16.gmra.mxu0 %v235
    %v274 = vpop.f32.mrf.mxu0
    %v275 = vadd.f32 0.0, %v274
    %v276 = vpop.f32.mrf.mxu0
    %v277 = vadd.f32 0.0, %v276
    %278 = vmatmul.bf16.gmra.mxu0 %v236
    %v279 = vpop.f32.mrf.mxu0
    %v280 = vadd.f32 0.0, %v279
    %v281 = vpop.f32.mrf.mxu0
    %v282 = vadd.f32 0.0, %v281
    %283 = vmatmul.bf16.gmra.mxu0 %v237
    %v284 = vpop.f32.mrf.mxu0
    %v285 = vadd.f32 0.0, %v284
    %v286 = vpop.f32.mrf.mxu0
    %v287 = vadd.f32 0.0, %v286
    %288 = vmatmul.bf16.gmra.mxu0 %v238
    %v289 = vpop.f32.mrf.mxu0
    %v290 = vadd.f32 0.0, %v289
    %v291 = vpop.f32.mrf.mxu0
    %v292 = vadd.f32 0.0, %v291
    %293 = vmatmul.bf16.gmra.mxu0 %v239
    %v294 = vpop.f32.mrf.mxu0
    %v295 = vadd.f32 0.0, %v294
    %v296 = vpop.f32.mrf.mxu0
    %v297 = vadd.f32 0.0, %v296
    %298 = vmatmul.bf16.gmra.mxu0 %v240
    %v299 = vpop.f32.mrf.mxu0
    %v300 = vadd.f32 0.0, %v299
    %v301 = vpop.f32.mrf.mxu0
    %302 = vdwg.mxu0
    %v303 = vld [vmem:[%s6] sm:$0xf]
    %v304 = vld [vmem:[%s6 + $0x4] sm:$0xf]
    %v305 = vld [vmem:[%s6 + $0x8] sm:$0xf]
    %v306 = vld [vmem:[%s6 + $0xc] sm:$0xf]
    %v307 = vld [vmem:[%s6 + $0x10] sm:$0xf]
    %v308 = vld [vmem:[%s6 + $0x14] sm:$0xf]
    %v309 = vld [vmem:[%s6 + $0x18] sm:$0xf]
    %v310 = vld [vmem:[%s6 + $0x1c] sm:$0xf]
    %v311 = vld [vmem:[%s6 + $0x20] sm:$0xf]
    %v312 = vld [vmem:[%s6 + $0x24] sm:$0xf]
    %v313 = vld [vmem:[%s6 + $0x28] sm:$0xf]
    %v314 = vld [vmem:[%s6 + $0x2c] sm:$0xf]
    %v315 = vld [vmem:[%s6 + $0x30] sm:$0xf]
    %v316 = vld [vmem:[%s6 + $0x34] sm:$0xf]
    %v317 = vld [vmem:[%s6 + $0x38] sm:$0xf]
    %v318 = vld [vmem:[%s6 + $0x3c] sm:$0xf]
    %v319 = vld [vmem:[%s7] sm:$0x1]
    %v321 = vperm.slane %v319, 0
    %v339 = vunpack.c.l.b16 %v157
    %v340 = vunpack.c.l.b16 %v158
    %v341 = vunpack.c.l.b16 %v159
    %v342 = vunpack.c.l.b16 %v160
    %v343 = vunpack.c.l.b16 %v161
    %v344 = vunpack.c.l.b16 %v162
    %v345 = vunpack.c.l.b16 %v163
    %v346 = vunpack.c.l.b16 %v164
    %v347 = vunpack.c.l.b16 %v165
    %v348 = vunpack.c.l.b16 %v166
    %v349 = vunpack.c.l.b16 %v167
    %v350 = vunpack.c.l.b16 %v168
    %v351 = vunpack.c.l.b16 %v169
    %v352 = vunpack.c.l.b16 %v170
    %v353 = vunpack.c.l.b16 %v171
    %v354 = vunpack.c.l.b16 %v172
    %v355 = vpack.c.b16 %v340, %v339
    %v356 = vpack.c.b16 %v342, %v341
    %v357 = vpack.c.b16 %v344, %v343
    %v358 = vpack.c.b16 %v346, %v345
    %v359 = vpack.c.b16 %v348, %v347
    %v360 = vpack.c.b16 %v350, %v349
    %v361 = vpack.c.b16 %v352, %v351
    %v362 = vpack.c.b16 %v354, %v353
    %v387 = vunpack.c.l.b16 %v303
    %v388 = vunpack.c.l.b16 %v304
    %v389 = vunpack.c.l.b16 %v305
    %v390 = vunpack.c.l.b16 %v306
    %v391 = vunpack.c.l.b16 %v307
    %v392 = vunpack.c.l.b16 %v308
    %v393 = vunpack.c.l.b16 %v309
    %v394 = vunpack.c.l.b16 %v310
    %v395 = vunpack.c.l.b16 %v311
    %v396 = vunpack.c.l.b16 %v312
    %v397 = vunpack.c.l.b16 %v313
    %v398 = vunpack.c.l.b16 %v314
    %v399 = vunpack.c.l.b16 %v315
    %v400 = vunpack.c.l.b16 %v316
    %v401 = vunpack.c.l.b16 %v317
    %v402 = vunpack.c.l.b16 %v318
    %v403 = vpack.c.b16 %v388, %v387
    %v404 = vpack.c.b16 %v390, %v389
    %v405 = vpack.c.b16 %v392, %v391
    %v406 = vpack.c.b16 %v394, %v393
    %v407 = vpack.c.b16 %v396, %v395
    %v408 = vpack.c.b16 %v398, %v397
    %v409 = vpack.c.b16 %v400, %v399
    %v410 = vpack.c.b16 %v402, %v401
    %419 = vmatpush.bf16.msra.mxu0 %v410
    %420 = vmatpush.bf16.msra.mxu0 %v409
    %421 = vmatpush.bf16.msra.mxu0 %v408
    %422 = vmatpush.bf16.msra.mxu0 %v407
    %423 = vmatpush.bf16.msra.mxu0 %v406
    %424 = vmatpush.bf16.msra.mxu0 %v405
    %425 = vmatpush.bf16.msra.mxu0 %v404
    %426 = vmatpush.bf16.msra.mxu0 %v403
    %427 = vmatmul.bf16.gmra.mxu0 %v355
    %v428 = vpop.f32.mrf.mxu0
    %v429 = vadd.f32 %v321, %v428
    %v430 = vpop.f32.mrf.mxu0
    %v431 = vadd.f32 %v321, %v430
    %432 = vmatmul.bf16.gmra.mxu0 %v356
    %v433 = vpop.f32.mrf.mxu0
    %v434 = vadd.f32 %v321, %v433
    %v435 = vpop.f32.mrf.mxu0
    %v436 = vadd.f32 %v321, %v435
    %437 = vmatmul.bf16.gmra.mxu0 %v357
    %v438 = vpop.f32.mrf.mxu0
    %v439 = vadd.f32 %v321, %v438
    %v440 = vpop.f32.mrf.mxu0
    %v441 = vadd.f32 %v321, %v440
    %442 = vmatmul.bf16.gmra.mxu0 %v358
    %v443 = vpop.f32.mrf.mxu0
    %v444 = vadd.f32 %v321, %v443
    %v445 = vpop.f32.mrf.mxu0
    %v446 = vadd.f32 %v321, %v445
    %447 = vmatmul.bf16.gmra.mxu0 %v359
    %v448 = vpop.f32.mrf.mxu0
    %v449 = vadd.f32 %v321, %v448
    %v450 = vpop.f32.mrf.mxu0
    %v451 = vadd.f32 %v321, %v450
    %452 = vmatmul.bf16.gmra.mxu0 %v360
    %v453 = vpop.f32.mrf.mxu0
    %v454 = vadd.f32 %v321, %v453
    %v455 = vpop.f32.mrf.mxu0
    %v456 = vadd.f32 %v321, %v455
    %457 = vmatmul.bf16.gmra.mxu0 %v361
    %v458 = vpop.f32.mrf.mxu0
    %v459 = vadd.f32 %v321, %v458
    %v460 = vpop.f32.mrf.mxu0
    %v461 = vadd.f32 %v321, %v460
    %462 = vmatmul.bf16.gmra.mxu0 %v362
    %v463 = vpop.f32.mrf.mxu0
    %v464 = vadd.f32 %v321, %v463
    %v465 = vpop.f32.mrf.mxu0
    %v466 = vadd.f32 %v321, %v465
    %467 = vdwg.mxu0
    %v468 = vadd.f32 %v260, %v429
    %v469 = vadd.f32 %v262, %v431
    %v470 = vadd.f32 %v265, %v434
    %v471 = vadd.f32 %v267, %v436
    %v472 = vadd.f32 %v270, %v439
    %v473 = vadd.f32 %v272, %v441
    %v474 = vadd.f32 %v275, %v444
    %v475 = vadd.f32 %v277, %v446
    %v476 = vadd.f32 %v280, %v449
    %v477 = vadd.f32 %v282, %v451
    %v478 = vadd.f32 %v285, %v454
    %v479 = vadd.f32 %v287, %v456
    %v480 = vadd.f32 %v290, %v459
    %v481 = vadd.f32 %v292, %v461
    %v482 = vadd.f32 %v295, %v464
    %v483 = vadd.f32 %v297, %v466
    %v484 = vmax.f32 %v468, 0.0
    %v485 = vmax.f32 %v469, 0.0
    %v486 = vmax.f32 %v470, 0.0
    %v487 = vmax.f32 %v471, 0.0
    %v488 = vmax.f32 %v472, 0.0
    %v489 = vmax.f32 %v473, 0.0
    %v490 = vmax.f32 %v474, 0.0
    %v491 = vmax.f32 %v475, 0.0
    %v492 = vmax.f32 %v476, 0.0
    %v493 = vmax.f32 %v477, 0.0
    %v494 = vmax.f32 %v478, 0.0
    %v495 = vmax.f32 %v479, 0.0
    %v496 = vmax.f32 %v480, 0.0
    %v497 = vmax.f32 %v481, 0.0
    %v498 = vmax.f32 %v482, 0.0
    %v499 = vmax.f32 %v483, 0.0
    %v500 = vpack.c.bf16 %v485, %v484
    %v501 = vpack.c.bf16 %v487, %v486
    %v502 = vpack.c.bf16 %v489, %v488
    %v503 = vpack.c.bf16 %v491, %v490
    %v504 = vpack.c.bf16 %v493, %v492
    %v505 = vpack.c.bf16 %v495, %v494
    %v506 = vpack.c.bf16 %v497, %v496
    %v507 = vpack.c.bf16 %v499, %v498
    %s508 = sadd.f32 %s189, 1.0
    %v509 = vstv %s508
    %v510 = vmul.f32 %v509, %v173
    %v511 = vmul.f32 %v509, %v174
    %v512 = vmul.f32 %v509, %v175
    %v513 = vmul.f32 %v509, %v176
    %v514 = vmul.f32 %v509, %v177
    %v515 = vmul.f32 %v509, %v178
    %v516 = vmul.f32 %v509, %v179
    %v517 = vmul.f32 %v509, %v180
    %v518 = vmul.f32 %v509, %v181
    %v519 = vmul.f32 %v509, %v182
    %v520 = vmul.f32 %v509, %v183
    %v521 = vmul.f32 %v509, %v184
    %v522 = vmul.f32 %v509, %v185
    %v523 = vmul.f32 %v509, %v186
    %v524 = vmul.f32 %v509, %v187
    %v525 = vmul.f32 %v509, %v188
    %v542 = vunpack.c.l.b16 %v125
    %v543 = vunpack.c.l.b16 %v126
    %v544 = vunpack.c.l.b16 %v127
    %v545 = vunpack.c.l.b16 %v128
    %v546 = vunpack.c.l.b16 %v129
    %v547 = vunpack.c.l.b16 %v130
    %v548 = vunpack.c.l.b16 %v131
    %v549 = vunpack.c.l.b16 %v132
    %v550 = vunpack.c.l.b16 %v133
    %v551 = vunpack.c.l.b16 %v134
    %v552 = vunpack.c.l.b16 %v135
    %v553 = vunpack.c.l.b16 %v136
    %v554 = vunpack.c.l.b16 %v137
    %v555 = vunpack.c.l.b16 %v138
    %v556 = vunpack.c.l.b16 %v139
    %v557 = vunpack.c.l.b16 %v140
    %v558 = vpack.c.b16 %v543, %v542
    %v559 = vpack.c.b16 %v545, %v544
    %v560 = vpack.c.b16 %v547, %v546
    %v561 = vpack.c.b16 %v549, %v548
    %v562 = vpack.c.b16 %v551, %v550
    %v563 = vpack.c.b16 %v553, %v552
    %v564 = vpack.c.b16 %v555, %v554
    %v565 = vpack.c.b16 %v557, %v556
    %574 = vmatpush.bf16.msra.mxu0 %v507
    %575 = vmatpush.bf16.msra.mxu0 %v506
    %576 = vmatpush.bf16.msra.mxu0 %v505
    %577 = vmatpush.bf16.msra.mxu0 %v504
    %578 = vmatpush.bf16.msra.mxu0 %v503
    %579 = vmatpush.bf16.msra.mxu0 %v502
    %580 = vmatpush.bf16.msra.mxu0 %v501
    %581 = vmatpush.bf16.msra.mxu0 %v500
    %582 = vmatmul.bf16.gmra.mxu0 %v558
    %v583 = vpop.f32.mrf.mxu0
    %v584 = vadd.f32 %v510, %v583
    %v585 = vpop.f32.mrf.mxu0
    %v586 = vadd.f32 %v511, %v585
    %587 = vmatmul.bf16.gmra.mxu0 %v559
    %v588 = vpop.f32.mrf.mxu0
    %v589 = vadd.f32 %v512, %v588
    %v590 = vpop.f32.mrf.mxu0
    %v591 = vadd.f32 %v513, %v590
    %592 = vmatmul.bf16.gmra.mxu0 %v560
    %v593 = vpop.f32.mrf.mxu0
    %v594 = vadd.f32 %v514, %v593
    %v595 = vpop.f32.mrf.mxu0
    %v596 = vadd.f32 %v515, %v595
    %597 = vmatmul.bf16.gmra.mxu0 %v561
    %v598 = vpop.f32.mrf.mxu0
    %v599 = vadd.f32 %v516, %v598
    %v600 = vpop.f32.mrf.mxu0
    %v601 = vadd.f32 %v517, %v600
    %602 = vmatmul.bf16.gmra.mxu0 %v562
    %v603 = vpop.f32.mrf.mxu0
    %v604 = vadd.f32 %v518, %v603
    %v605 = vpop.f32.mrf.mxu0
    %v606 = vadd.f32 %v519, %v605
    %607 = vmatmul.bf16.gmra.mxu0 %v563
    %v608 = vpop.f32.mrf.mxu0
    %v609 = vadd.f32 %v520, %v608
    %v610 = vpop.f32.mrf.mxu0
    %v611 = vadd.f32 %v521, %v610
    %612 = vmatmul.bf16.gmra.mxu0 %v564
    %v613 = vpop.f32.mrf.mxu0
    %v614 = vadd.f32 %v522, %v613
    %v615 = vpop.f32.mrf.mxu0
    %v616 = vadd.f32 %v523, %v615
    %617 = vmatmul.bf16.gmra.mxu0 %v565
    %v618 = vpop.f32.mrf.mxu0
    %v619 = vadd.f32 %v524, %v618
    %v620 = vpop.f32.mrf.mxu0
    %v621 = vadd.f32 %v525, %v620
    %622 = vdwg.mxu0
    %v623 = vld [vmem:[%s8] sm:$0xf]
    %v624 = vld [vmem:[%s8 + $0x4] sm:$0xf]
    %v625 = vld [vmem:[%s8 + $0x8] sm:$0xf]
    %v626 = vld [vmem:[%s8 + $0xc] sm:$0xf]
    %v627 = vld [vmem:[%s8 + $0x10] sm:$0xf]
    %v628 = vld [vmem:[%s8 + $0x14] sm:$0xf]
    %v629 = vld [vmem:[%s8 + $0x18] sm:$0xf]
    %v630 = vld [vmem:[%s8 + $0x1c] sm:$0xf]
    %v631 = vld [vmem:[%s8 + $0x20] sm:$0xf]
    %v632 = vld [vmem:[%s8 + $0x24] sm:$0xf]
    %v633 = vld [vmem:[%s8 + $0x28] sm:$0xf]
    %v634 = vld [vmem:[%s8 + $0x2c] sm:$0xf]
    %v635 = vld [vmem:[%s8 + $0x30] sm:$0xf]
    %v636 = vld [vmem:[%s8 + $0x34] sm:$0xf]
    %v637 = vld [vmem:[%s8 + $0x38] sm:$0xf]
    %v638 = vld [vmem:[%s8 + $0x3c] sm:$0xf]
    %v639 = vpack.c.bf16 %v586, %v584
    %v640 = vpack.c.bf16 %v591, %v589
    %v641 = vpack.c.bf16 %v596, %v594
    %v642 = vpack.c.bf16 %v601, %v599
    %v643 = vpack.c.bf16 %v606, %v604
    %v644 = vpack.c.bf16 %v611, %v609
    %v645 = vpack.c.bf16 %v616, %v614
    %v646 = vpack.c.bf16 %v621, %v619
    %v647 = vld [vmem:[%s9] sm:$0x1]
    %v649 = vperm.slane %v647, 0
    %v667 = vunpack.c.l.b16 %v623
    %v668 = vunpack.c.l.b16 %v624
    %v669 = vunpack.c.l.b16 %v625
    %v670 = vunpack.c.l.b16 %v626
    %v671 = vunpack.c.l.b16 %v627
    %v672 = vunpack.c.l.b16 %v628
    %v673 = vunpack.c.l.b16 %v629
    %v674 = vunpack.c.l.b16 %v630
    %v675 = vunpack.c.l.b16 %v631
    %v676 = vunpack.c.l.b16 %v632
    %v677 = vunpack.c.l.b16 %v633
    %v678 = vunpack.c.l.b16 %v634
    %v679 = vunpack.c.l.b16 %v635
    %v680 = vunpack.c.l.b16 %v636
    %v681 = vunpack.c.l.b16 %v637
    %v682 = vunpack.c.l.b16 %v638
    %v683 = vpack.c.b16 %v668, %v667
    %v684 = vpack.c.b16 %v670, %v669
    %v685 = vpack.c.b16 %v672, %v671
    %v686 = vpack.c.b16 %v674, %v673
    %v687 = vpack.c.b16 %v676, %v675
    %v688 = vpack.c.b16 %v678, %v677
    %v689 = vpack.c.b16 %v680, %v679
    %v690 = vpack.c.b16 %v682, %v681
    %699 = vmatpush.bf16.msra.mxu0 %v690
    %700 = vmatpush.bf16.msra.mxu0 %v689
    %701 = vmatpush.bf16.msra.mxu0 %v688
    %702 = vmatpush.bf16.msra.mxu0 %v687
    %703 = vmatpush.bf16.msra.mxu0 %v686
    %704 = vmatpush.bf16.msra.mxu0 %v685
    %705 = vmatpush.bf16.msra.mxu0 %v684
    %706 = vmatpush.bf16.msra.mxu0 %v683
    %707 = vmatmul.bf16.gmra.mxu0 %v639
    %v708 = vpop.f32.mrf.mxu0
    %v709 = vadd.f32 %v649, %v708
    %v710 = vpop.f32.mrf.mxu0
    %v711 = vadd.f32 %v649, %v710
    %712 = vmatmul.bf16.gmra.mxu0 %v640
    %v713 = vpop.f32.mrf.mxu0
    %v714 = vadd.f32 %v649, %v713
    %v715 = vpop.f32.mrf.mxu0
    %v716 = vadd.f32 %v649, %v715
    %717 = vmatmul.bf16.gmra.mxu0 %v641
    %v718 = vpop.f32.mrf.mxu0
    %v719 = vadd.f32 %v649, %v718
    %v720 = vpop.f32.mrf.mxu0
    %v721 = vadd.f32 %v649, %v720
    %722 = vmatmul.bf16.gmra.mxu0 %v642
    %v723 = vpop.f32.mrf.mxu0
    %v724 = vadd.f32 %v649, %v723
    %v725 = vpop.f32.mrf.mxu0
    %v726 = vadd.f32 %v649, %v725
    %727 = vmatmul.bf16.gmra.mxu0 %v643
    %v728 = vpop.f32.mrf.mxu0
    %v729 = vadd.f32 %v649, %v728
    %v730 = vpop.f32.mrf.mxu0
    %v731 = vadd.f32 %v649, %v730
    %732 = vmatmul.bf16.gmra.mxu0 %v644
    %v733 = vpop.f32.mrf.mxu0
    %v734 = vadd.f32 %v649, %v733
    %v735 = vpop.f32.mrf.mxu0
    %v736 = vadd.f32 %v649, %v735
    %737 = vmatmul.bf16.gmra.mxu0 %v645
    %v738 = vpop.f32.mrf.mxu0
    %v739 = vadd.f32 %v649, %v738
    %v740 = vpop.f32.mrf.mxu0
    %v741 = vadd.f32 %v649, %v740
    %742 = vmatmul.bf16.gmra.mxu0 %v646
    %v743 = vpop.f32.mrf.mxu0
    %v744 = vadd.f32 %v649, %v743
    %v745 = vpop.f32.mrf.mxu0
    %v746 = vadd.f32 %v649, %v745
    %747 = vdwg.mxu0
    %v748 = vmax.f32 %v709, 0.0
    %v749 = vmax.f32 %v711, 0.0
    %v750 = vmax.f32 %v714, 0.0
    %v751 = vmax.f32 %v716, 0.0
    %v752 = vmax.f32 %v719, 0.0
    %v753 = vmax.f32 %v721, 0.0
    %v754 = vmax.f32 %v724, 0.0
    %v755 = vmax.f32 %v726, 0.0
    %v756 = vmax.f32 %v729, 0.0
    %v757 = vmax.f32 %v731, 0.0
    %v758 = vmax.f32 %v734, 0.0
    %v759 = vmax.f32 %v736, 0.0
    %v760 = vmax.f32 %v739, 0.0
    %v761 = vmax.f32 %v741, 0.0
    %v762 = vmax.f32 %v744, 0.0
    %v763 = vmax.f32 %v746, 0.0
    %v764 = vld [vmem:[%s10] sm:$0xf]
    %v765 = vld [vmem:[%s10 + $0x4] sm:$0xf]
    %v766 = vld [vmem:[%s10 + $0x8] sm:$0xf]
    %v767 = vld [vmem:[%s10 + $0xc] sm:$0xf]
    %v768 = vld [vmem:[%s10 + $0x10] sm:$0xf]
    %v769 = vld [vmem:[%s10 + $0x14] sm:$0xf]
    %v770 = vld [vmem:[%s10 + $0x18] sm:$0xf]
    %v771 = vld [vmem:[%s10 + $0x1c] sm:$0xf]
    %v772 = vld [vmem:[%s10 + $0x20] sm:$0xf]
    %v773 = vld [vmem:[%s10 + $0x24] sm:$0xf]
    %v774 = vld [vmem:[%s10 + $0x28] sm:$0xf]
    %v775 = vld [vmem:[%s10 + $0x2c] sm:$0xf]
    %v776 = vld [vmem:[%s10 + $0x30] sm:$0xf]
    %v777 = vld [vmem:[%s10 + $0x34] sm:$0xf]
    %v778 = vld [vmem:[%s10 + $0x38] sm:$0xf]
    %v779 = vld [vmem:[%s10 + $0x3c] sm:$0xf]
    %v780 = vpack.c.bf16 %v749, %v748
    %v781 = vpack.c.bf16 %v751, %v750
    %v782 = vpack.c.bf16 %v753, %v752
    %v783 = vpack.c.bf16 %v755, %v754
    %v784 = vpack.c.bf16 %v757, %v756
    %v785 = vpack.c.bf16 %v759, %v758
    %v786 = vpack.c.bf16 %v761, %v760
    %v787 = vpack.c.bf16 %v763, %v762
    %v788 = vld [vmem:[%s11] sm:$0x1]
    %v790 = vperm.slane %v788, 0
    %v808 = vunpack.c.l.b16 %v764
    %v809 = vunpack.c.l.b16 %v765
    %v810 = vunpack.c.l.b16 %v766
    %v811 = vunpack.c.l.b16 %v767
    %v812 = vunpack.c.l.b16 %v768
    %v813 = vunpack.c.l.b16 %v769
    %v814 = vunpack.c.l.b16 %v770
    %v815 = vunpack.c.l.b16 %v771
    %v816 = vunpack.c.l.b16 %v772
    %v817 = vunpack.c.l.b16 %v773
    %v818 = vunpack.c.l.b16 %v774
    %v819 = vunpack.c.l.b16 %v775
    %v820 = vunpack.c.l.b16 %v776
    %v821 = vunpack.c.l.b16 %v777
    %v822 = vunpack.c.l.b16 %v778
    %v823 = vunpack.c.l.b16 %v779
    %v824 = vpack.c.b16 %v809, %v808
    %v825 = vpack.c.b16 %v811, %v810
    %v826 = vpack.c.b16 %v813, %v812
    %v827 = vpack.c.b16 %v815, %v814
    %v828 = vpack.c.b16 %v817, %v816
    %v829 = vpack.c.b16 %v819, %v818
    %v830 = vpack.c.b16 %v821, %v820
    %v831 = vpack.c.b16 %v823, %v822
    %840 = vmatpush.bf16.msra.mxu0 %v831
    %841 = vmatpush.bf16.msra.mxu0 %v830
    %842 = vmatpush.bf16.msra.mxu0 %v829
    %843 = vmatpush.bf16.msra.mxu0 %v828
    %844 = vmatpush.bf16.msra.mxu0 %v827
    %845 = vmatpush.bf16.msra.mxu0 %v826
    %846 = vmatpush.bf16.msra.mxu0 %v825
    %847 = vmatpush.bf16.msra.mxu0 %v824
    %848 = vmatmul.bf16.gmra.mxu0 %v780
    %v849 = vpop.f32.mrf.mxu0
    %v850 = vadd.f32 %v790, %v849
    %v851 = vpop.f32.mrf.mxu0
    %v852 = vadd.f32 %v790, %v851
    %853 = vmatmul.bf16.gmra.mxu0 %v781
    %v854 = vpop.f32.mrf.mxu0
    %v855 = vadd.f32 %v790, %v854
    %v856 = vpop.f32.mrf.mxu0
    %v857 = vadd.f32 %v790, %v856
    %858 = vmatmul.bf16.gmra.mxu0 %v782
    %v859 = vpop.f32.mrf.mxu0
    %v860 = vadd.f32 %v790, %v859
    %v861 = vpop.f32.mrf.mxu0
    %v862 = vadd.f32 %v790, %v861
    %863 = vmatmul.bf16.gmra.mxu0 %v783
    %v864 = vpop.f32.mrf.mxu0
    %v865 = vadd.f32 %v790, %v864
    %v866 = vpop.f32.mrf.mxu0
    %v867 = vadd.f32 %v790, %v866
    %868 = vmatmul.bf16.gmra.mxu0 %v784
    %v869 = vpop.f32.mrf.mxu0
    %v870 = vadd.f32 %v790, %v869
    %v871 = vpop.f32.mrf.mxu0
    %v872 = vadd.f32 %v790, %v871
    %873 = vmatmul.bf16.gmra.mxu0 %v785
    %v874 = vpop.f32.mrf.mxu0
    %v875 = vadd.f32 %v790, %v874
    %v876 = vpop.f32.mrf.mxu0
    %v877 = vadd.f32 %v790, %v876
    %878 = vmatmul.bf16.gmra.mxu0 %v786
    %v879 = vpop.f32.mrf.mxu0
    %v880 = vadd.f32 %v790, %v879
    %v881 = vpop.f32.mrf.mxu0
    %v882 = vadd.f32 %v790, %v881
    %883 = vmatmul.bf16.gmra.mxu0 %v787
    %v884 = vpop.f32.mrf.mxu0
    %v885 = vadd.f32 %v790, %v884
    %v886 = vpop.f32.mrf.mxu0
    %v887 = vadd.f32 %v790, %v886
    %888 = vdwg.mxu0
    %s889 = sld [smem:[#allocation2 + $0x3]]
    %s890 = sld [smem:[#allocation2 + $0x4]]
    %v891 = vadd.f32 %v300, 0.0
    %v892 = vld [vmem:[#allocation5] sm:$0xf]
    %v893 = vld [vmem:[#allocation5 + $0x4] sm:$0xf]
    %v894 = vld [vmem:[#allocation5 + $0x8] sm:$0xf]
    %v895 = vld [vmem:[#allocation5 + $0xc] sm:$0xf]
    %v896 = vld [vmem:[#allocation5 + $0x10] sm:$0xf]
    %v897 = vld [vmem:[#allocation5 + $0x14] sm:$0xf]
    %v898 = vld [vmem:[#allocation5 + $0x18] sm:$0xf]
    %v899 = vld [vmem:[#allocation5 + $0x1c] sm:$0xf]
    %v900 = vld [vmem:[#allocation5 + $0x20] sm:$0xf]
    %v901 = vld [vmem:[#allocation5 + $0x24] sm:$0xf]
    %v902 = vld [vmem:[#allocation5 + $0x28] sm:$0xf]
    %v903 = vld [vmem:[#allocation5 + $0x2c] sm:$0xf]
    %v904 = vld [vmem:[#allocation5 + $0x30] sm:$0xf]
    %v905 = vld [vmem:[#allocation5 + $0x34] sm:$0xf]
    %v906 = vld [vmem:[#allocation5 + $0x38] sm:$0xf]
    %v907 = vld [vmem:[#allocation5 + $0x3c] sm:$0xf]
    %v908 = vpack.c.bf16 %v891, %v891
    %v909 = vld [vmem:[%s13] sm:$0x1]
    %v911 = vperm.slane %v909, 0
    %v929 = vunpack.c.l.b16 %v892
    %v930 = vunpack.c.l.b16 %v893
    %v931 = vunpack.c.l.b16 %v894
    %v932 = vunpack.c.l.b16 %v895
    %v933 = vunpack.c.l.b16 %v896
    %v934 = vunpack.c.l.b16 %v897
    %v935 = vunpack.c.l.b16 %v898
    %v936 = vunpack.c.l.b16 %v899
    %v937 = vunpack.c.l.b16 %v900
    %v938 = vunpack.c.l.b16 %v901
    %v939 = vunpack.c.l.b16 %v902
    %v940 = vunpack.c.l.b16 %v903
    %v941 = vunpack.c.l.b16 %v904
    %v942 = vunpack.c.l.b16 %v905
    %v943 = vunpack.c.l.b16 %v906
    %v944 = vunpack.c.l.b16 %v907
    %v945 = vpack.c.b16 %v930, %v929
    %v946 = vpack.c.b16 %v932, %v931
    %v947 = vpack.c.b16 %v934, %v933
    %v948 = vpack.c.b16 %v936, %v935
    %v949 = vpack.c.b16 %v938, %v937
    %v950 = vpack.c.b16 %v940, %v939
    %v951 = vpack.c.b16 %v942, %v941
    %v952 = vpack.c.b16 %v944, %v943
    %961 = vmatpush.bf16.msra.mxu0 %v952
    %962 = vmatpush.bf16.msra.mxu0 %v951
    %963 = vmatpush.bf16.msra.mxu0 %v950
    %964 = vmatpush.bf16.msra.mxu0 %v949
    %965 = vmatpush.bf16.msra.mxu0 %v948
    %966 = vmatpush.bf16.msra.mxu0 %v947
    %967 = vmatpush.bf16.msra.mxu0 %v946
    %968 = vmatpush.bf16.msra.mxu0 %v945
    %969 = vmatmul.bf16.gmra.mxu0 %v908
    %v970 = vpop.f32.mrf.mxu0
    %v971 = vadd.f32 %v911, %v970
    %v972 = vpop.f32.mrf.mxu0
    %973 = vdwg.mxu0
    %vm974 = vcmp.ge.f32.partialorder %v971, 0.0
    %v975 = vstv %s889
    %v976 = vmul.f32 %v975, %v971
    %v977 = vsel %vm974, %v971, %v976
    %v978 = vld [vmem:[#allocation6] sm:$0xf]
    %v979 = vld [vmem:[#allocation6 + $0x4] sm:$0xf]
    %v980 = vld [vmem:[#allocation6 + $0x8] sm:$0xf]
    %v981 = vld [vmem:[#allocation6 + $0xc] sm:$0xf]
    %v982 = vld [vmem:[#allocation6 + $0x10] sm:$0xf]
    %v983 = vld [vmem:[#allocation6 + $0x14] sm:$0xf]
    %v984 = vld [vmem:[#allocation6 + $0x18] sm:$0xf]
    %v985 = vld [vmem:[#allocation6 + $0x1c] sm:$0xf]
    %v986 = vld [vmem:[#allocation6 + $0x20] sm:$0xf]
    %v987 = vld [vmem:[#allocation6 + $0x24] sm:$0xf]
    %v988 = vld [vmem:[#allocation6 + $0x28] sm:$0xf]
    %v989 = vld [vmem:[#allocation6 + $0x2c] sm:$0xf]
    %v990 = vld [vmem:[#allocation6 + $0x30] sm:$0xf]
    %v991 = vld [vmem:[#allocation6 + $0x34] sm:$0xf]
    %v992 = vld [vmem:[#allocation6 + $0x38] sm:$0xf]
    %v993 = vld [vmem:[#allocation6 + $0x3c] sm:$0xf]
    %v994 = vpack.c.bf16 %v977, %v977
    %v995 = vld [vmem:[%s15] sm:$0x1]
    %v997 = vperm.slane %v995, 0
    %v1015 = vunpack.c.l.b16 %v978
    %v1016 = vunpack.c.l.b16 %v979
    %v1017 = vunpack.c.l.b16 %v980
    %v1018 = vunpack.c.l.b16 %v981
    %v1019 = vunpack.c.l.b16 %v982
    %v1020 = vunpack.c.l.b16 %v983
    %v1021 = vunpack.c.l.b16 %v984
    %v1022 = vunpack.c.l.b16 %v985
    %v1023 = vunpack.c.l.b16 %v986
    %v1024 = vunpack.c.l.b16 %v987
    %v1025 = vunpack.c.l.b16 %v988
    %v1026 = vunpack.c.l.b16 %v989
    %v1027 = vunpack.c.l.b16 %v990
    %v1028 = vunpack.c.l.b16 %v991
    %v1029 = vunpack.c.l.b16 %v992
    %v1030 = vunpack.c.l.b16 %v993
    %v1031 = vpack.c.b16 %v1016, %v1015
    %v1032 = vpack.c.b16 %v1018, %v1017
    %v1033 = vpack.c.b16 %v1020, %v1019
    %v1034 = vpack.c.b16 %v1022, %v1021
    %v1035 = vpack.c.b16 %v1024, %v1023
    %v1036 = vpack.c.b16 %v1026, %v1025
    %v1037 = vpack.c.b16 %v1028, %v1027
    %v1038 = vpack.c.b16 %v1030, %v1029
    %1047 = vmatpush.bf16.msra.mxu0 %v1038
    %1048 = vmatpush.bf16.msra.mxu0 %v1037
    %1049 = vmatpush.bf16.msra.mxu0 %v1036
    %1050 = vmatpush.bf16.msra.mxu0 %v1035
    %1051 = vmatpush.bf16.msra.mxu0 %v1034
    %1052 = vmatpush.bf16.msra.mxu0 %v1033
    %1053 = vmatpush.bf16.msra.mxu0 %v1032
    %1054 = vmatpush.bf16.msra.mxu0 %v1031
    %1055 = vmatmul.bf16.gmra.mxu0 %v994
    %v1056 = vpop.f32.mrf.mxu0
    %v1057 = vadd.f32 %v997, %v1056
    %v1058 = vpop.f32.mrf.mxu0
    %1059 = vdwg.mxu0
    %vm1060 = vcmp.ge.f32.partialorder %v1057, 0.0
    %v1061 = vstv %s890
    %v1062 = vmul.f32 %v1061, %v1057
    %v1063 = vsel %vm1060, %v1057, %v1062
    %s1064 = sld [smem:[#allocation2 + $0x1]]
    %v1065 = vpack.c.bf16 %v1063, %v1063
    %v1082 = vunpack.c.l.b16 %v141
    %v1083 = vunpack.c.l.b16 %v142
    %v1084 = vunpack.c.l.b16 %v143
    %v1085 = vunpack.c.l.b16 %v144
    %v1086 = vunpack.c.l.b16 %v145
    %v1087 = vunpack.c.l.b16 %v146
    %v1088 = vunpack.c.l.b16 %v147
    %v1089 = vunpack.c.l.b16 %v148
    %v1090 = vunpack.c.l.b16 %v149
    %v1091 = vunpack.c.l.b16 %v150
    %v1092 = vunpack.c.l.b16 %v151
    %v1093 = vunpack.c.l.b16 %v152
    %v1094 = vunpack.c.l.b16 %v153
    %v1095 = vunpack.c.l.b16 %v154
    %v1096 = vunpack.c.l.b16 %v155
    %v1097 = vunpack.c.l.b16 %v156
    %v1098 = vpack.c.b16 %v1083, %v1082
    %v1099 = vpack.c.b16 %v1085, %v1084
    %v1100 = vpack.c.b16 %v1087, %v1086
    %v1101 = vpack.c.b16 %v1089, %v1088
    %v1102 = vpack.c.b16 %v1091, %v1090
    %v1103 = vpack.c.b16 %v1093, %v1092
    %v1104 = vpack.c.b16 %v1095, %v1094
    %v1105 = vpack.c.b16 %v1097, %v1096
    %vm1106 = vcmask 64512
    %v1108 = vsel %vm1106, %v1098, 0
    %v1111 = vsel %vm1106, %v1099, 0
    %v1114 = vsel %vm1106, %v1100, 0
    %v1117 = vsel %vm1106, %v1101, 0
    %v1120 = vsel %vm1106, %v1102, 0
    %v1123 = vsel %vm1106, %v1103, 0
    %v1126 = vsel %vm1106, %v1104, 0
    %v1129 = vsel %vm1106, %v1105, 0
    %vm1131 = vcmask 1043456
    %v1133 = vsel %vm1131, %v1065, 0
    %1135 = vmatpush.bf16.msra.mxu0 0
    %1136 = vmatpush.bf16.msra.mxu0 0
    %1137 = vmatpush.bf16.msra.mxu0 0
    %1138 = vmatpush.bf16.msra.mxu0 0
    %1139 = vmatpush.bf16.msra.mxu0 0
    %1140 = vmatpush.bf16.msra.mxu0 0
    %1141 = vmatpush.bf16.msra.mxu0 0
    %1142 = vmatpush.bf16.msra.mxu0 %v1133
    %1143 = vmatmul.bf16.gmra.mxu0 %v1108
    %v1144 = vpop.f32.mrf.mxu0
    %v1145 = vadd.f32 0.0, %v1144
    %v1146 = vpop.f32.mrf.mxu0
    %v1147 = vadd.f32 0.0, %v1146
    %1148 = vmatmul.bf16.gmra.mxu0 %v1111
    %v1149 = vpop.f32.mrf.mxu0
    %v1150 = vadd.f32 0.0, %v1149
    %v1151 = vpop.f32.mrf.mxu0
    %v1152 = vadd.f32 0.0, %v1151
    %1153 = vmatmul.bf16.gmra.mxu0 %v1114
    %v1154 = vpop.f32.mrf.mxu0
    %v1155 = vadd.f32 0.0, %v1154
    %v1156 = vpop.f32.mrf.mxu0
    %v1157 = vadd.f32 0.0, %v1156
    %1158 = vmatmul.bf16.gmra.mxu0 %v1117
    %v1159 = vpop.f32.mrf.mxu0
    %v1160 = vadd.f32 0.0, %v1159
    %v1161 = vpop.f32.mrf.mxu0
    %v1162 = vadd.f32 0.0, %v1161
    %1163 = vmatmul.bf16.gmra.mxu0 %v1120
    %v1164 = vpop.f32.mrf.mxu0
    %v1165 = vadd.f32 0.0, %v1164
    %v1166 = vpop.f32.mrf.mxu0
    %v1167 = vadd.f32 0.0, %v1166
    %1168 = vmatmul.bf16.gmra.mxu0 %v1123
    %v1169 = vpop.f32.mrf.mxu0
    %v1170 = vadd.f32 0.0, %v1169
    %v1171 = vpop.f32.mrf.mxu0
    %v1172 = vadd.f32 0.0, %v1171
    %1173 = vmatmul.bf16.gmra.mxu0 %v1126
    %v1174 = vpop.f32.mrf.mxu0
    %v1175 = vadd.f32 0.0, %v1174
    %v1176 = vpop.f32.mrf.mxu0
    %v1177 = vadd.f32 0.0, %v1176
    %1178 = vmatmul.bf16.gmra.mxu0 %v1129
    %v1179 = vpop.f32.mrf.mxu0
    %v1180 = vadd.f32 0.0, %v1179
    %v1181 = vpop.f32.mrf.mxu0
    %v1182 = vadd.f32 0.0, %v1181
    %1183 = vdwg.mxu0
    %v1184 = vadd.f32 %v850, %v1145
    %v1185 = vadd.f32 %v852, %v1147
    %v1186 = vadd.f32 %v855, %v1150
    %v1187 = vadd.f32 %v857, %v1152
    %v1188 = vadd.f32 %v860, %v1155
    %v1189 = vadd.f32 %v862, %v1157
    %v1190 = vadd.f32 %v865, %v1160
    %v1191 = vadd.f32 %v867, %v1162
    %v1192 = vadd.f32 %v870, %v1165
    %v1193 = vadd.f32 %v872, %v1167
    %v1194 = vadd.f32 %v875, %v1170
    %v1195 = vadd.f32 %v877, %v1172
    %v1196 = vadd.f32 %v880, %v1175
    %v1197 = vadd.f32 %v882, %v1177
    %v1198 = vadd.f32 %v885, %v1180
    %v1199 = vadd.f32 %v887, %v1182
    %v1200 = vpack.c.bf16 %v1185, %v1184
    %v1201 = vpack.c.bf16 %v1187, %v1186
    %v1202 = vpack.c.bf16 %v1189, %v1188
    %v1203 = vpack.c.bf16 %v1191, %v1190
    %v1204 = vpack.c.bf16 %v1193, %v1192
    %v1205 = vpack.c.bf16 %v1195, %v1194
    %v1206 = vpack.c.bf16 %v1197, %v1196
    %v1207 = vpack.c.bf16 %v1199, %v1198
    %1208 = vmatpush.bf16.msra.mxu0 %v1207
    %1209 = vmatpush.bf16.msra.mxu0 %v1206
    %1210 = vmatpush.bf16.msra.mxu0 %v1205
    %1211 = vmatpush.bf16.msra.mxu0 %v1204
    %1212 = vmatpush.bf16.msra.mxu0 %v1203
    %1213 = vmatpush.bf16.msra.mxu0 %v1202
    %1214 = vmatpush.bf16.msra.mxu0 %v1201
    %1215 = vmatpush.bf16.msra.mxu0 %v1200
    %1216 = vmatmul.bf16.gmra.mxu0 %v232
    %v1217 = vpop.f32.mrf.mxu0
    %v1218 = vadd.f32 0.0, %v1217
    %v1219 = vpop.f32.mrf.mxu0
    %v1220 = vadd.f32 0.0, %v1219
    %1221 = vmatmul.bf16.gmra.mxu0 %v233
    %v1222 = vpop.f32.mrf.mxu0
    %v1223 = vadd.f32 0.0, %v1222
    %v1224 = vpop.f32.mrf.mxu0
    %v1225 = vadd.f32 0.0, %v1224
    %1226 = vmatmul.bf16.gmra.mxu0 %v234
    %v1227 = vpop.f32.mrf.mxu0
    %v1228 = vadd.f32 0.0, %v1227
    %v1229 = vpop.f32.mrf.mxu0
    %v1230 = vadd.f32 0.0, %v1229
    %1231 = vmatmul.bf16.gmra.mxu0 %v235
    %v1232 = vpop.f32.mrf.mxu0
    %v1233 = vadd.f32 0.0, %v1232
    %v1234 = vpop.f32.mrf.mxu0
    %v1235 = vadd.f32 0.0, %v1234
    %1236 = vmatmul.bf16.gmra.mxu0 %v236
    %v1237 = vpop.f32.mrf.mxu0
    %v1238 = vadd.f32 0.0, %v1237
    %v1239 = vpop.f32.mrf.mxu0
    %v1240 = vadd.f32 0.0, %v1239
    %1241 = vmatmul.bf16.gmra.mxu0 %v237
    %v1242 = vpop.f32.mrf.mxu0
    %v1243 = vadd.f32 0.0, %v1242
    %v1244 = vpop.f32.mrf.mxu0
    %v1245 = vadd.f32 0.0, %v1244
    %1246 = vmatmul.bf16.gmra.mxu0 %v238
    %v1247 = vpop.f32.mrf.mxu0
    %v1248 = vadd.f32 0.0, %v1247
    %v1249 = vpop.f32.mrf.mxu0
    %v1250 = vadd.f32 0.0, %v1249
    %1251 = vmatmul.bf16.gmra.mxu0 %v239
    %v1252 = vpop.f32.mrf.mxu0
    %v1253 = vadd.f32 0.0, %v1252
    %v1254 = vpop.f32.mrf.mxu0
    %v1255 = vadd.f32 0.0, %v1254
    %1256 = vmatmul.bf16.gmra.mxu0 %v240
    %v1257 = vpop.f32.mrf.mxu0
    %v1258 = vadd.f32 0.0, %v1257
    %v1259 = vpop.f32.mrf.mxu0
    %1260 = vdwg.mxu0
    %s1261 = scalar_lea.vmem %s6, 64
    %v1262 = vld [vmem:[%s1261] sm:$0xf]
    %v1263 = vld [vmem:[%s1261 + $0x4] sm:$0xf]
    %v1264 = vld [vmem:[%s1261 + $0x8] sm:$0xf]
    %v1265 = vld [vmem:[%s1261 + $0xc] sm:$0xf]
    %v1266 = vld [vmem:[%s1261 + $0x10] sm:$0xf]
    %v1267 = vld [vmem:[%s1261 + $0x14] sm:$0xf]
    %v1268 = vld [vmem:[%s1261 + $0x18] sm:$0xf]
    %v1269 = vld [vmem:[%s1261 + $0x1c] sm:$0xf]
    %v1270 = vld [vmem:[%s1261 + $0x20] sm:$0xf]
    %v1271 = vld [vmem:[%s1261 + $0x24] sm:$0xf]
    %v1272 = vld [vmem:[%s1261 + $0x28] sm:$0xf]
    %v1273 = vld [vmem:[%s1261 + $0x2c] sm:$0xf]
    %v1274 = vld [vmem:[%s1261 + $0x30] sm:$0xf]
    %v1275 = vld [vmem:[%s1261 + $0x34] sm:$0xf]
    %v1276 = vld [vmem:[%s1261 + $0x38] sm:$0xf]
    %v1277 = vld [vmem:[%s1261 + $0x3c] sm:$0xf]
    %s1278 = scalar_lea.vmem %s7, 1
    %v1279 = vld [vmem:[%s1278] sm:$0x1]
    %v1281 = vperm.slane %v1279, 0
    %v1299 = vunpack.c.l.b16 %v1262
    %v1300 = vunpack.c.l.b16 %v1263
    %v1301 = vunpack.c.l.b16 %v1264
    %v1302 = vunpack.c.l.b16 %v1265
    %v1303 = vunpack.c.l.b16 %v1266
    %v1304 = vunpack.c.l.b16 %v1267
    %v1305 = vunpack.c.l.b16 %v1268
    %v1306 = vunpack.c.l.b16 %v1269
    %v1307 = vunpack.c.l.b16 %v1270
    %v1308 = vunpack.c.l.b16 %v1271
    %v1309 = vunpack.c.l.b16 %v1272
    %v1310 = vunpack.c.l.b16 %v1273
    %v1311 = vunpack.c.l.b16 %v1274
    %v1312 = vunpack.c.l.b16 %v1275
    %v1313 = vunpack.c.l.b16 %v1276
    %v1314 = vunpack.c.l.b16 %v1277
    %v1315 = vpack.c.b16 %v1300, %v1299
    %v1316 = vpack.c.b16 %v1302, %v1301
    %v1317 = vpack.c.b16 %v1304, %v1303
    %v1318 = vpack.c.b16 %v1306, %v1305
    %v1319 = vpack.c.b16 %v1308, %v1307
    %v1320 = vpack.c.b16 %v1310, %v1309
    %v1321 = vpack.c.b16 %v1312, %v1311
    %v1322 = vpack.c.b16 %v1314, %v1313
    %1331 = vmatpush.bf16.msra.mxu0 %v1322
    %1332 = vmatpush.bf16.msra.mxu0 %v1321
    %1333 = vmatpush.bf16.msra.mxu0 %v1320
    %1334 = vmatpush.bf16.msra.mxu0 %v1319
    %1335 = vmatpush.bf16.msra.mxu0 %v1318
    %1336 = vmatpush.bf16.msra.mxu0 %v1317
    %1337 = vmatpush.bf16.msra.mxu0 %v1316
    %1338 = vmatpush.bf16.msra.mxu0 %v1315
    %1339 = vmatmul.bf16.gmra.mxu0 %v355
    %v1340 = vpop.f32.mrf.mxu0
    %v1341 = vadd.f32 %v1281, %v1340
    %v1342 = vpop.f32.mrf.mxu0
    %v1343 = vadd.f32 %v1281, %v1342
    %1344 = vmatmul.bf16.gmra.mxu0 %v356
    %v1345 = vpop.f32.mrf.mxu0
    %v1346 = vadd.f32 %v1281, %v1345
    %v1347 = vpop.f32.mrf.mxu0
    %v1348 = vadd.f32 %v1281, %v1347
    %1349 = vmatmul.bf16.gmra.mxu0 %v357
    %v1350 = vpop.f32.mrf.mxu0
    %v1351 = vadd.f32 %v1281, %v1350
    %v1352 = vpop.f32.mrf.mxu0
    %v1353 = vadd.f32 %v1281, %v1352
    %1354 = vmatmul.bf16.gmra.mxu0 %v358
    %v1355 = vpop.f32.mrf.mxu0
    %v1356 = vadd.f32 %v1281, %v1355
    %v1357 = vpop.f32.mrf.mxu0
    %v1358 = vadd.f32 %v1281, %v1357
    %1359 = vmatmul.bf16.gmra.mxu0 %v359
    %v1360 = vpop.f32.mrf.mxu0
    %v1361 = vadd.f32 %v1281, %v1360
    %v1362 = vpop.f32.mrf.mxu0
    %v1363 = vadd.f32 %v1281, %v1362
    %1364 = vmatmul.bf16.gmra.mxu0 %v360
    %v1365 = vpop.f32.mrf.mxu0
    %v1366 = vadd.f32 %v1281, %v1365
    %v1367 = vpop.f32.mrf.mxu0
    %v1368 = vadd.f32 %v1281, %v1367
    %1369 = vmatmul.bf16.gmra.mxu0 %v361
    %v1370 = vpop.f32.mrf.mxu0
    %v1371 = vadd.f32 %v1281, %v1370
    %v1372 = vpop.f32.mrf.mxu0
    %v1373 = vadd.f32 %v1281, %v1372
    %1374 = vmatmul.bf16.gmra.mxu0 %v362
    %v1375 = vpop.f32.mrf.mxu0
    %v1376 = vadd.f32 %v1281, %v1375
    %v1377 = vpop.f32.mrf.mxu0
    %v1378 = vadd.f32 %v1281, %v1377
    %1379 = vdwg.mxu0
    %v1380 = vadd.f32 %v1218, %v1341
    %v1381 = vadd.f32 %v1220, %v1343
    %v1382 = vadd.f32 %v1223, %v1346
    %v1383 = vadd.f32 %v1225, %v1348
    %v1384 = vadd.f32 %v1228, %v1351
    %v1385 = vadd.f32 %v1230, %v1353
    %v1386 = vadd.f32 %v1233, %v1356
    %v1387 = vadd.f32 %v1235, %v1358
    %v1388 = vadd.f32 %v1238, %v1361
    %v1389 = vadd.f32 %v1240, %v1363
    %v1390 = vadd.f32 %v1243, %v1366
    %v1391 = vadd.f32 %v1245, %v1368
    %v1392 = vadd.f32 %v1248, %v1371
    %v1393 = vadd.f32 %v1250, %v1373
    %v1394 = vadd.f32 %v1253, %v1376
    %v1395 = vadd.f32 %v1255, %v1378
    %v1396 = vmax.f32 %v1380, 0.0
    %v1397 = vmax.f32 %v1381, 0.0
    %v1398 = vmax.f32 %v1382, 0.0
    %v1399 = vmax.f32 %v1383, 0.0
    %v1400 = vmax.f32 %v1384, 0.0
    %v1401 = vmax.f32 %v1385, 0.0
    %v1402 = vmax.f32 %v1386, 0.0
    %v1403 = vmax.f32 %v1387, 0.0
    %v1404 = vmax.f32 %v1388, 0.0
    %v1405 = vmax.f32 %v1389, 0.0
    %v1406 = vmax.f32 %v1390, 0.0
    %v1407 = vmax.f32 %v1391, 0.0
    %v1408 = vmax.f32 %v1392, 0.0
    %v1409 = vmax.f32 %v1393, 0.0
    %v1410 = vmax.f32 %v1394, 0.0
    %v1411 = vmax.f32 %v1395, 0.0
    %v1412 = vpack.c.bf16 %v1397, %v1396
    %v1413 = vpack.c.bf16 %v1399, %v1398
    %v1414 = vpack.c.bf16 %v1401, %v1400
    %v1415 = vpack.c.bf16 %v1403, %v1402
    %v1416 = vpack.c.bf16 %v1405, %v1404
    %v1417 = vpack.c.bf16 %v1407, %v1406
    %v1418 = vpack.c.bf16 %v1409, %v1408
    %v1419 = vpack.c.bf16 %v1411, %v1410
    %s1420 = sadd.f32 %s1064, 1.0
    %v1421 = vstv %s1420
    %v1422 = vmul.f32 %v1421, %v1184
    %v1423 = vmul.f32 %v1421, %v1185
    %v1424 = vmul.f32 %v1421, %v1186
    %v1425 = vmul.f32 %v1421, %v1187
    %v1426 = vmul.f32 %v1421, %v1188
    %v1427 = vmul.f32 %v1421, %v1189
    %v1428 = vmul.f32 %v1421, %v1190
    %v1429 = vmul.f32 %v1421, %v1191
    %v1430 = vmul.f32 %v1421, %v1192
    %v1431 = vmul.f32 %v1421, %v1193
    %v1432 = vmul.f32 %v1421, %v1194
    %v1433 = vmul.f32 %v1421, %v1195
    %v1434 = vmul.f32 %v1421, %v1196
    %v1435 = vmul.f32 %v1421, %v1197
    %v1436 = vmul.f32 %v1421, %v1198
    %v1437 = vmul.f32 %v1421, %v1199
    %1438 = vmatpush.bf16.msra.mxu0 %v1419
    %1439 = vmatpush.bf16.msra.mxu0 %v1418
    %1440 = vmatpush.bf16.msra.mxu0 %v1417
    %1441 = vmatpush.bf16.msra.mxu0 %v1416
    %1442 = vmatpush.bf16.msra.mxu0 %v1415
    %1443 = vmatpush.bf16.msra.mxu0 %v1414
    %1444 = vmatpush.bf16.msra.mxu0 %v1413
    %1445 = vmatpush.bf16.msra.mxu0 %v1412
    %1446 = vmatmul.bf16.gmra.mxu0 %v558
    %v1447 = vpop.f32.mrf.mxu0
    %v1448 = vadd.f32 %v1422, %v1447
    %v1449 = vpop.f32.mrf.mxu0
    %v1450 = vadd.f32 %v1423, %v1449
    %1451 = vmatmul.bf16.gmra.mxu0 %v559
    %v1452 = vpop.f32.mrf.mxu0
    %v1453 = vadd.f32 %v1424, %v1452
    %v1454 = vpop.f32.mrf.mxu0
    %v1455 = vadd.f32 %v1425, %v1454
    %1456 = vmatmul.bf16.gmra.mxu0 %v560
    %v1457 = vpop.f32.mrf.mxu0
    %v1458 = vadd.f32 %v1426, %v1457
    %v1459 = vpop.f32.mrf.mxu0
    %v1460 = vadd.f32 %v1427, %v1459
    %1461 = vmatmul.bf16.gmra.mxu0 %v561
    %v1462 = vpop.f32.mrf.mxu0
    %v1463 = vadd.f32 %v1428, %v1462
    %v1464 = vpop.f32.mrf.mxu0
    %v1465 = vadd.f32 %v1429, %v1464
    %1466 = vmatmul.bf16.gmra.mxu0 %v562
    %v1467 = vpop.f32.mrf.mxu0
    %v1468 = vadd.f32 %v1430, %v1467
    %v1469 = vpop.f32.mrf.mxu0
    %v1470 = vadd.f32 %v1431, %v1469
    %1471 = vmatmul.bf16.gmra.mxu0 %v563
    %v1472 = vpop.f32.mrf.mxu0
    %v1473 = vadd.f32 %v1432, %v1472
    %v1474 = vpop.f32.mrf.mxu0
    %v1475 = vadd.f32 %v1433, %v1474
    %1476 = vmatmul.bf16.gmra.mxu0 %v564
    %v1477 = vpop.f32.mrf.mxu0
    %v1478 = vadd.f32 %v1434, %v1477
    %v1479 = vpop.f32.mrf.mxu0
    %v1480 = vadd.f32 %v1435, %v1479
    %1481 = vmatmul.bf16.gmra.mxu0 %v565
    %v1482 = vpop.f32.mrf.mxu0
    %v1483 = vadd.f32 %v1436, %v1482
    %v1484 = vpop.f32.mrf.mxu0
    %v1485 = vadd.f32 %v1437, %v1484
    %1486 = vdwg.mxu0
    %s1487 = scalar_lea.vmem %s8, 64
    %v1488 = vld [vmem:[%s1487] sm:$0xf]
    %v1489 = vld [vmem:[%s1487 + $0x4] sm:$0xf]
    %v1490 = vld [vmem:[%s1487 + $0x8] sm:$0xf]
    %v1491 = vld [vmem:[%s1487 + $0xc] sm:$0xf]
    %v1492 = vld [vmem:[%s1487 + $0x10] sm:$0xf]
    %v1493 = vld [vmem:[%s1487 + $0x14] sm:$0xf]
    %v1494 = vld [vmem:[%s1487 + $0x18] sm:$0xf]
    %v1495 = vld [vmem:[%s1487 + $0x1c] sm:$0xf]
    %v1496 = vld [vmem:[%s1487 + $0x20] sm:$0xf]
    %v1497 = vld [vmem:[%s1487 + $0x24] sm:$0xf]
    %v1498 = vld [vmem:[%s1487 + $0x28] sm:$0xf]
    %v1499 = vld [vmem:[%s1487 + $0x2c] sm:$0xf]
    %v1500 = vld [vmem:[%s1487 + $0x30] sm:$0xf]
    %v1501 = vld [vmem:[%s1487 + $0x34] sm:$0xf]
    %v1502 = vld [vmem:[%s1487 + $0x38] sm:$0xf]
    %v1503 = vld [vmem:[%s1487 + $0x3c] sm:$0xf]
    %v1504 = vpack.c.bf16 %v1450, %v1448
    %v1505 = vpack.c.bf16 %v1455, %v1453
    %v1506 = vpack.c.bf16 %v1460, %v1458
    %v1507 = vpack.c.bf16 %v1465, %v1463
    %v1508 = vpack.c.bf16 %v1470, %v1468
    %v1509 = vpack.c.bf16 %v1475, %v1473
    %v1510 = vpack.c.bf16 %v1480, %v1478
    %v1511 = vpack.c.bf16 %v1485, %v1483
    %s1512 = scalar_lea.vmem %s9, 1
    %v1513 = vld [vmem:[%s1512] sm:$0x1]
    %v1515 = vperm.slane %v1513, 0
    %v1533 = vunpack.c.l.b16 %v1488
    %v1534 = vunpack.c.l.b16 %v1489
    %v1535 = vunpack.c.l.b16 %v1490
    %v1536 = vunpack.c.l.b16 %v1491
    %v1537 = vunpack.c.l.b16 %v1492
    %v1538 = vunpack.c.l.b16 %v1493
    %v1539 = vunpack.c.l.b16 %v1494
    %v1540 = vunpack.c.l.b16 %v1495
    %v1541 = vunpack.c.l.b16 %v1496
    %v1542 = vunpack.c.l.b16 %v1497
    %v1543 = vunpack.c.l.b16 %v1498
    %v1544 = vunpack.c.l.b16 %v1499
    %v1545 = vunpack.c.l.b16 %v1500
    %v1546 = vunpack.c.l.b16 %v1501
    %v1547 = vunpack.c.l.b16 %v1502
    %v1548 = vunpack.c.l.b16 %v1503
    %v1549 = vpack.c.b16 %v1534, %v1533
    %v1550 = vpack.c.b16 %v1536, %v1535
    %v1551 = vpack.c.b16 %v1538, %v1537
    %v1552 = vpack.c.b16 %v1540, %v1539
    %v1553 = vpack.c.b16 %v1542, %v1541
    %v1554 = vpack.c.b16 %v1544, %v1543
    %v1555 = vpack.c.b16 %v1546, %v1545
    %v1556 = vpack.c.b16 %v1548, %v1547
    %1565 = vmatpush.bf16.msra.mxu0 %v1556
    %1566 = vmatpush.bf16.msra.mxu0 %v1555
    %1567 = vmatpush.bf16.msra.mxu0 %v1554
    %1568 = vmatpush.bf16.msra.mxu0 %v1553
    %1569 = vmatpush.bf16.msra.mxu0 %v1552
    %1570 = vmatpush.bf16.msra.mxu0 %v1551
    %1571 = vmatpush.bf16.msra.mxu0 %v1550
    %1572 = vmatpush.bf16.msra.mxu0 %v1549
    %1573 = vmatmul.bf16.gmra.mxu0 %v1504
    %v1574 = vpop.f32.mrf.mxu0
    %v1575 = vadd.f32 %v1515, %v1574
    %v1576 = vpop.f32.mrf.mxu0
    %v1577 = vadd.f32 %v1515, %v1576
    %1578 = vmatmul.bf16.gmra.mxu0 %v1505
    %v1579 = vpop.f32.mrf.mxu0
    %v1580 = vadd.f32 %v1515, %v1579
    %v1581 = vpop.f32.mrf.mxu0
    %v1582 = vadd.f32 %v1515, %v1581
    %1583 = vmatmul.bf16.gmra.mxu0 %v1506
    %v1584 = vpop.f32.mrf.mxu0
    %v1585 = vadd.f32 %v1515, %v1584
    %v1586 = vpop.f32.mrf.mxu0
    %v1587 = vadd.f32 %v1515, %v1586
    %1588 = vmatmul.bf16.gmra.mxu0 %v1507
    %v1589 = vpop.f32.mrf.mxu0
    %v1590 = vadd.f32 %v1515, %v1589
    %v1591 = vpop.f32.mrf.mxu0
    %v1592 = vadd.f32 %v1515, %v1591
    %1593 = vmatmul.bf16.gmra.mxu0 %v1508
    %v1594 = vpop.f32.mrf.mxu0
    %v1595 = vadd.f32 %v1515, %v1594
    %v1596 = vpop.f32.mrf.mxu0
    %v1597 = vadd.f32 %v1515, %v1596
    %1598 = vmatmul.bf16.gmra.mxu0 %v1509
    %v1599 = vpop.f32.mrf.mxu0
    %v1600 = vadd.f32 %v1515, %v1599
    %v1601 = vpop.f32.mrf.mxu0
    %v1602 = vadd.f32 %v1515, %v1601
    %1603 = vmatmul.bf16.gmra.mxu0 %v1510
    %v1604 = vpop.f32.mrf.mxu0
    %v1605 = vadd.f32 %v1515, %v1604
    %v1606 = vpop.f32.mrf.mxu0
    %v1607 = vadd.f32 %v1515, %v1606
    %1608 = vmatmul.bf16.gmra.mxu0 %v1511
    %v1609 = vpop.f32.mrf.mxu0
    %v1610 = vadd.f32 %v1515, %v1609
    %v1611 = vpop.f32.mrf.mxu0
    %v1612 = vadd.f32 %v1515, %v1611
    %1613 = vdwg.mxu0
    %v1614 = vmax.f32 %v1575, 0.0
    %v1615 = vmax.f32 %v1577, 0.0
    %v1616 = vmax.f32 %v1580, 0.0
    %v1617 = vmax.f32 %v1582, 0.0
    %v1618 = vmax.f32 %v1585, 0.0
    %v1619 = vmax.f32 %v1587, 0.0
    %v1620 = vmax.f32 %v1590, 0.0
    %v1621 = vmax.f32 %v1592, 0.0
    %v1622 = vmax.f32 %v1595, 0.0
    %v1623 = vmax.f32 %v1597, 0.0
    %v1624 = vmax.f32 %v1600, 0.0
    %v1625 = vmax.f32 %v1602, 0.0
    %v1626 = vmax.f32 %v1605, 0.0
    %v1627 = vmax.f32 %v1607, 0.0
    %v1628 = vmax.f32 %v1610, 0.0
    %v1629 = vmax.f32 %v1612, 0.0
    %s1630 = scalar_lea.vmem %s10, 64
    %v1631 = vld [vmem:[%s1630] sm:$0xf]
    %v1632 = vld [vmem:[%s1630 + $0x4] sm:$0xf]
    %v1633 = vld [vmem:[%s1630 + $0x8] sm:$0xf]
    %v1634 = vld [vmem:[%s1630 + $0xc] sm:$0xf]
    %v1635 = vld [vmem:[%s1630 + $0x10] sm:$0xf]
    %v1636 = vld [vmem:[%s1630 + $0x14] sm:$0xf]
    %v1637 = vld [vmem:[%s1630 + $0x18] sm:$0xf]
    %v1638 = vld [vmem:[%s1630 + $0x1c] sm:$0xf]
    %v1639 = vld [vmem:[%s1630 + $0x20] sm:$0xf]
    %v1640 = vld [vmem:[%s1630 + $0x24] sm:$0xf]
    %v1641 = vld [vmem:[%s1630 + $0x28] sm:$0xf]
    %v1642 = vld [vmem:[%s1630 + $0x2c] sm:$0xf]
    %v1643 = vld [vmem:[%s1630 + $0x30] sm:$0xf]
    %v1644 = vld [vmem:[%s1630 + $0x34] sm:$0xf]
    %v1645 = vld [vmem:[%s1630 + $0x38] sm:$0xf]
    %v1646 = vld [vmem:[%s1630 + $0x3c] sm:$0xf]
    %v1647 = vpack.c.bf16 %v1615, %v1614
    %v1648 = vpack.c.bf16 %v1617, %v1616
    %v1649 = vpack.c.bf16 %v1619, %v1618
    %v1650 = vpack.c.bf16 %v1621, %v1620
    %v1651 = vpack.c.bf16 %v1623, %v1622
    %v1652 = vpack.c.bf16 %v1625, %v1624
    %v1653 = vpack.c.bf16 %v1627, %v1626
    %v1654 = vpack.c.bf16 %v1629, %v1628
    %s1655 = scalar_lea.vmem %s11, 1
    %v1656 = vld [vmem:[%s1655] sm:$0x1]
    %v1658 = vperm.slane %v1656, 0
    %v1676 = vunpack.c.l.b16 %v1631
    %v1677 = vunpack.c.l.b16 %v1632
    %v1678 = vunpack.c.l.b16 %v1633
    %v1679 = vunpack.c.l.b16 %v1634
    %v1680 = vunpack.c.l.b16 %v1635
    %v1681 = vunpack.c.l.b16 %v1636
    %v1682 = vunpack.c.l.b16 %v1637
    %v1683 = vunpack.c.l.b16 %v1638
    %v1684 = vunpack.c.l.b16 %v1639
    %v1685 = vunpack.c.l.b16 %v1640
    %v1686 = vunpack.c.l.b16 %v1641
    %v1687 = vunpack.c.l.b16 %v1642
    %v1688 = vunpack.c.l.b16 %v1643
    %v1689 = vunpack.c.l.b16 %v1644
    %v1690 = vunpack.c.l.b16 %v1645
    %v1691 = vunpack.c.l.b16 %v1646
    %v1692 = vpack.c.b16 %v1677, %v1676
    %v1693 = vpack.c.b16 %v1679, %v1678
    %v1694 = vpack.c.b16 %v1681, %v1680
    %v1695 = vpack.c.b16 %v1683, %v1682
    %v1696 = vpack.c.b16 %v1685, %v1684
    %v1697 = vpack.c.b16 %v1687, %v1686
    %v1698 = vpack.c.b16 %v1689, %v1688
    %v1699 = vpack.c.b16 %v1691, %v1690
    %1708 = vmatpush.bf16.msra.mxu0 %v1699
    %1709 = vmatpush.bf16.msra.mxu0 %v1698
    %1710 = vmatpush.bf16.msra.mxu0 %v1697
    %1711 = vmatpush.bf16.msra.mxu0 %v1696
    %1712 = vmatpush.bf16.msra.mxu0 %v1695
    %1713 = vmatpush.bf16.msra.mxu0 %v1694
    %1714 = vmatpush.bf16.msra.mxu0 %v1693
    %1715 = vmatpush.bf16.msra.mxu0 %v1692
    %1716 = vmatmul.bf16.gmra.mxu0 %v1647
    %v1717 = vpop.f32.mrf.mxu0
    %v1718 = vadd.f32 %v1658, %v1717
    %v1719 = vpop.f32.mrf.mxu0
    %v1720 = vadd.f32 %v1658, %v1719
    %1721 = vmatmul.bf16.gmra.mxu0 %v1648
    %v1722 = vpop.f32.mrf.mxu0
    %v1723 = vadd.f32 %v1658, %v1722
    %v1724 = vpop.f32.mrf.mxu0
    %v1725 = vadd.f32 %v1658, %v1724
    %1726 = vmatmul.bf16.gmra.mxu0 %v1649
    %v1727 = vpop.f32.mrf.mxu0
    %v1728 = vadd.f32 %v1658, %v1727
    %v1729 = vpop.f32.mrf.mxu0
    %v1730 = vadd.f32 %v1658, %v1729
    %1731 = vmatmul.bf16.gmra.mxu0 %v1650
    %v1732 = vpop.f32.mrf.mxu0
    %v1733 = vadd.f32 %v1658, %v1732
    %v1734 = vpop.f32.mrf.mxu0
    %v1735 = vadd.f32 %v1658, %v1734
    %1736 = vmatmul.bf16.gmra.mxu0 %v1651
    %v1737 = vpop.f32.mrf.mxu0
    %v1738 = vadd.f32 %v1658, %v1737
    %v1739 = vpop.f32.mrf.mxu0
    %v1740 = vadd.f32 %v1658, %v1739
    %1741 = vmatmul.bf16.gmra.mxu0 %v1652
    %v1742 = vpop.f32.mrf.mxu0
    %v1743 = vadd.f32 %v1658, %v1742
    %v1744 = vpop.f32.mrf.mxu0
    %v1745 = vadd.f32 %v1658, %v1744
    %1746 = vmatmul.bf16.gmra.mxu0 %v1653
    %v1747 = vpop.f32.mrf.mxu0
    %v1748 = vadd.f32 %v1658, %v1747
    %v1749 = vpop.f32.mrf.mxu0
    %v1750 = vadd.f32 %v1658, %v1749
    %1751 = vmatmul.bf16.gmra.mxu0 %v1654
    %v1752 = vpop.f32.mrf.mxu0
    %v1753 = vadd.f32 %v1658, %v1752
    %v1754 = vpop.f32.mrf.mxu0
    %v1755 = vadd.f32 %v1658, %v1754
    %1756 = vdwg.mxu0
    %s1757 = sld [smem:[#allocation2 + $0x5]]
    %s1758 = sld [smem:[#allocation2 + $0x6]]
    %v1759 = vadd.f32 %v1258, %v1063
    %s1760 = scalar_lea.vmem [#allocation5], 64
    %v1761 = vld [vmem:[%s1760] sm:$0xf]
    %v1762 = vld [vmem:[%s1760 + $0x4] sm:$0xf]
    %v1763 = vld [vmem:[%s1760 + $0x8] sm:$0xf]
    %v1764 = vld [vmem:[%s1760 + $0xc] sm:$0xf]
    %v1765 = vld [vmem:[%s1760 + $0x10] sm:$0xf]
    %v1766 = vld [vmem:[%s1760 + $0x14] sm:$0xf]
    %v1767 = vld [vmem:[%s1760 + $0x18] sm:$0xf]
    %v1768 = vld [vmem:[%s1760 + $0x1c] sm:$0xf]
    %v1769 = vld [vmem:[%s1760 + $0x20] sm:$0xf]
    %v1770 = vld [vmem:[%s1760 + $0x24] sm:$0xf]
    %v1771 = vld [vmem:[%s1760 + $0x28] sm:$0xf]
    %v1772 = vld [vmem:[%s1760 + $0x2c] sm:$0xf]
    %v1773 = vld [vmem:[%s1760 + $0x30] sm:$0xf]
    %v1774 = vld [vmem:[%s1760 + $0x34] sm:$0xf]
    %v1775 = vld [vmem:[%s1760 + $0x38] sm:$0xf]
    %v1776 = vld [vmem:[%s1760 + $0x3c] sm:$0xf]
    %v1777 = vpack.c.bf16 %v1759, %v1759
    %s1778 = scalar_lea.vmem %s13, 1
    %v1779 = vld [vmem:[%s1778] sm:$0x1]
    %v1781 = vperm.slane %v1779, 0
    %v1799 = vunpack.c.l.b16 %v1761
    %v1800 = vunpack.c.l.b16 %v1762
    %v1801 = vunpack.c.l.b16 %v1763
    %v1802 = vunpack.c.l.b16 %v1764
    %v1803 = vunpack.c.l.b16 %v1765
    %v1804 = vunpack.c.l.b16 %v1766
    %v1805 = vunpack.c.l.b16 %v1767
    %v1806 = vunpack.c.l.b16 %v1768
    %v1807 = vunpack.c.l.b16 %v1769
    %v1808 = vunpack.c.l.b16 %v1770
    %v1809 = vunpack.c.l.b16 %v1771
    %v1810 = vunpack.c.l.b16 %v1772
    %v1811 = vunpack.c.l.b16 %v1773
    %v1812 = vunpack.c.l.b16 %v1774
    %v1813 = vunpack.c.l.b16 %v1775
    %v1814 = vunpack.c.l.b16 %v1776
    %v1815 = vpack.c.b16 %v1800, %v1799
    %v1816 = vpack.c.b16 %v1802, %v1801
    %v1817 = vpack.c.b16 %v1804, %v1803
    %v1818 = vpack.c.b16 %v1806, %v1805
    %v1819 = vpack.c.b16 %v1808, %v1807
    %v1820 = vpack.c.b16 %v1810, %v1809
    %v1821 = vpack.c.b16 %v1812, %v1811
    %v1822 = vpack.c.b16 %v1814, %v1813
    %1831 = vmatpush.bf16.msra.mxu0 %v1822
    %1832 = vmatpush.bf16.msra.mxu0 %v1821
    %1833 = vmatpush.bf16.msra.mxu0 %v1820
    %1834 = vmatpush.bf16.msra.mxu0 %v1819
    %1835 = vmatpush.bf16.msra.mxu0 %v1818
    %1836 = vmatpush.bf16.msra.mxu0 %v1817
    %1837 = vmatpush.bf16.msra.mxu0 %v1816
    %1838 = vmatpush.bf16.msra.mxu0 %v1815
    %1839 = vmatmul.bf16.gmra.mxu0 %v1777
    %v1840 = vpop.f32.mrf.mxu0
    %v1841 = vadd.f32 %v1781, %v1840
    %v1842 = vpop.f32.mrf.mxu0
    %1843 = vdwg.mxu0
    %vm1844 = vcmp.ge.f32.partialorder %v1841, 0.0
    %v1845 = vstv %s1757
    %v1846 = vmul.f32 %v1845, %v1841
    %v1847 = vsel %vm1844, %v1841, %v1846
    %s1848 = scalar_lea.vmem [#allocation6], 64
    %v1849 = vld [vmem:[%s1848] sm:$0xf]
    %v1850 = vld [vmem:[%s1848 + $0x4] sm:$0xf]
    %v1851 = vld [vmem:[%s1848 + $0x8] sm:$0xf]
    %v1852 = vld [vmem:[%s1848 + $0xc] sm:$0xf]
    %v1853 = vld [vmem:[%s1848 + $0x10] sm:$0xf]
    %v1854 = vld [vmem:[%s1848 + $0x14] sm:$0xf]
    %v1855 = vld [vmem:[%s1848 + $0x18] sm:$0xf]
    %v1856 = vld [vmem:[%s1848 + $0x1c] sm:$0xf]
    %v1857 = vld [vmem:[%s1848 + $0x20] sm:$0xf]
    %v1858 = vld [vmem:[%s1848 + $0x24] sm:$0xf]
    %v1859 = vld [vmem:[%s1848 + $0x28] sm:$0xf]
    %v1860 = vld [vmem:[%s1848 + $0x2c] sm:$0xf]
    %v1861 = vld [vmem:[%s1848 + $0x30] sm:$0xf]
    %v1862 = vld [vmem:[%s1848 + $0x34] sm:$0xf]
    %v1863 = vld [vmem:[%s1848 + $0x38] sm:$0xf]
    %v1864 = vld [vmem:[%s1848 + $0x3c] sm:$0xf]
    %v1865 = vpack.c.bf16 %v1847, %v1847
    %s1866 = scalar_lea.vmem %s15, 1
    %v1867 = vld [vmem:[%s1866] sm:$0x1]
    %v1869 = vperm.slane %v1867, 0
    %v1887 = vunpack.c.l.b16 %v1849
    %v1888 = vunpack.c.l.b16 %v1850
    %v1889 = vunpack.c.l.b16 %v1851
    %v1890 = vunpack.c.l.b16 %v1852
    %v1891 = vunpack.c.l.b16 %v1853
    %v1892 = vunpack.c.l.b16 %v1854
    %v1893 = vunpack.c.l.b16 %v1855
    %v1894 = vunpack.c.l.b16 %v1856
    %v1895 = vunpack.c.l.b16 %v1857
    %v1896 = vunpack.c.l.b16 %v1858
    %v1897 = vunpack.c.l.b16 %v1859
    %v1898 = vunpack.c.l.b16 %v1860
    %v1899 = vunpack.c.l.b16 %v1861
    %v1900 = vunpack.c.l.b16 %v1862
    %v1901 = vunpack.c.l.b16 %v1863
    %v1902 = vunpack.c.l.b16 %v1864
    %v1903 = vpack.c.b16 %v1888, %v1887
    %v1904 = vpack.c.b16 %v1890, %v1889
    %v1905 = vpack.c.b16 %v1892, %v1891
    %v1906 = vpack.c.b16 %v1894, %v1893
    %v1907 = vpack.c.b16 %v1896, %v1895
    %v1908 = vpack.c.b16 %v1898, %v1897
    %v1909 = vpack.c.b16 %v1900, %v1899
    %v1910 = vpack.c.b16 %v1902, %v1901
    %1919 = vmatpush.bf16.msra.mxu0 %v1910
    %1920 = vmatpush.bf16.msra.mxu0 %v1909
    %1921 = vmatpush.bf16.msra.mxu0 %v1908
    %1922 = vmatpush.bf16.msra.mxu0 %v1907
    %1923 = vmatpush.bf16.msra.mxu0 %v1906
    %1924 = vmatpush.bf16.msra.mxu0 %v1905
    %1925 = vmatpush.bf16.msra.mxu0 %v1904
    %1926 = vmatpush.bf16.msra.mxu0 %v1903
    %1927 = vmatmul.bf16.gmra.mxu0 %v1865
    %v1928 = vpop.f32.mrf.mxu0
    %v1929 = vadd.f32 %v1869, %v1928
    %v1930 = vpop.f32.mrf.mxu0
    %1931 = vdwg.mxu0
    %vm1932 = vcmp.ge.f32.partialorder %v1929, 0.0
    %v1933 = vstv %s1758
    %v1934 = vmul.f32 %v1933, %v1929
    %v1935 = vsel %vm1932, %v1929, %v1934
    %s1936 = sld [smem:[#allocation2 + $0x2]]
    %v1937 = vpack.c.bf16 %v1935, %v1935
    %v1939 = vsel %vm1131, %v1937, 0
    %1941 = vmatpush.bf16.msra.mxu0 0
    %1942 = vmatpush.bf16.msra.mxu0 0
    %1943 = vmatpush.bf16.msra.mxu0 0
    %1944 = vmatpush.bf16.msra.mxu0 0
    %1945 = vmatpush.bf16.msra.mxu0 0
    %1946 = vmatpush.bf16.msra.mxu0 0
    %1947 = vmatpush.bf16.msra.mxu0 0
    %1948 = vmatpush.bf16.msra.mxu0 %v1939
    %1949 = vmatmul.bf16.gmra.mxu0 %v1108
    %v1950 = vpop.f32.mrf.mxu0
    %v1951 = vadd.f32 0.0, %v1950
    %v1952 = vpop.f32.mrf.mxu0
    %v1953 = vadd.f32 0.0, %v1952
    %1954 = vmatmul.bf16.gmra.mxu0 %v1111
    %v1955 = vpop.f32.mrf.mxu0
    %v1956 = vadd.f32 0.0, %v1955
    %v1957 = vpop.f32.mrf.mxu0
    %v1958 = vadd.f32 0.0, %v1957
    %1959 = vmatmul.bf16.gmra.mxu0 %v1114
    %v1960 = vpop.f32.mrf.mxu0
    %v1961 = vadd.f32 0.0, %v1960
    %v1962 = vpop.f32.mrf.mxu0
    %v1963 = vadd.f32 0.0, %v1962
    %1964 = vmatmul.bf16.gmra.mxu0 %v1117
    %v1965 = vpop.f32.mrf.mxu0
    %v1966 = vadd.f32 0.0, %v1965
    %v1967 = vpop.f32.mrf.mxu0
    %v1968 = vadd.f32 0.0, %v1967
    %1969 = vmatmul.bf16.gmra.mxu0 %v1120
    %v1970 = vpop.f32.mrf.mxu0
    %v1971 = vadd.f32 0.0, %v1970
    %v1972 = vpop.f32.mrf.mxu0
    %v1973 = vadd.f32 0.0, %v1972
    %1974 = vmatmul.bf16.gmra.mxu0 %v1123
    %v1975 = vpop.f32.mrf.mxu0
    %v1976 = vadd.f32 0.0, %v1975
    %v1977 = vpop.f32.mrf.mxu0
    %v1978 = vadd.f32 0.0, %v1977
    %1979 = vmatmul.bf16.gmra.mxu0 %v1126
    %v1980 = vpop.f32.mrf.mxu0
    %v1981 = vadd.f32 0.0, %v1980
    %v1982 = vpop.f32.mrf.mxu0
    %v1983 = vadd.f32 0.0, %v1982
    %1984 = vmatmul.bf16.gmra.mxu0 %v1129
    %v1985 = vpop.f32.mrf.mxu0
    %v1986 = vadd.f32 0.0, %v1985
    %v1987 = vpop.f32.mrf.mxu0
    %v1988 = vadd.f32 0.0, %v1987
    %1989 = vdwg.mxu0
    %v1990 = vadd.f32 %v1718, %v1951
    %v1991 = vadd.f32 %v1720, %v1953
    %v1992 = vadd.f32 %v1723, %v1956
    %v1993 = vadd.f32 %v1725, %v1958
    %v1994 = vadd.f32 %v1728, %v1961
    %v1995 = vadd.f32 %v1730, %v1963
    %v1996 = vadd.f32 %v1733, %v1966
    %v1997 = vadd.f32 %v1735, %v1968
    %v1998 = vadd.f32 %v1738, %v1971
    %v1999 = vadd.f32 %v1740, %v1973
    %v2000 = vadd.f32 %v1743, %v1976
    %v2001 = vadd.f32 %v1745, %v1978
    %v2002 = vadd.f32 %v1748, %v1981
    %v2003 = vadd.f32 %v1750, %v1983
    %v2004 = vadd.f32 %v1753, %v1986
    %v2005 = vadd.f32 %v1755, %v1988
    %v2006 = vpack.c.bf16 %v1991, %v1990
    %v2007 = vpack.c.bf16 %v1993, %v1992
    %v2008 = vpack.c.bf16 %v1995, %v1994
    %v2009 = vpack.c.bf16 %v1997, %v1996
    %v2010 = vpack.c.bf16 %v1999, %v1998
    %v2011 = vpack.c.bf16 %v2001, %v2000
    %v2012 = vpack.c.bf16 %v2003, %v2002
    %v2013 = vpack.c.bf16 %v2005, %v2004
    %2014 = vmatpush.bf16.msra.mxu0 %v2013
    %2015 = vmatpush.bf16.msra.mxu0 %v2012
    %2016 = vmatpush.bf16.msra.mxu0 %v2011
    %2017 = vmatpush.bf16.msra.mxu0 %v2010
    %2018 = vmatpush.bf16.msra.mxu0 %v2009
    %2019 = vmatpush.bf16.msra.mxu0 %v2008
    %2020 = vmatpush.bf16.msra.mxu0 %v2007
    %2021 = vmatpush.bf16.msra.mxu0 %v2006
    %2022 = vmatmul.bf16.gmra.mxu0 %v232
    %v2023 = vpop.f32.mrf.mxu0
    %v2024 = vadd.f32 0.0, %v2023
    %v2025 = vpop.f32.mrf.mxu0
    %v2026 = vadd.f32 0.0, %v2025
    %2027 = vmatmul.bf16.gmra.mxu0 %v233
    %v2028 = vpop.f32.mrf.mxu0
    %v2029 = vadd.f32 0.0, %v2028
    %v2030 = vpop.f32.mrf.mxu0
    %v2031 = vadd.f32 0.0, %v2030
    %2032 = vmatmul.bf16.gmra.mxu0 %v234
    %v2033 = vpop.f32.mrf.mxu0
    %v2034 = vadd.f32 0.0, %v2033
    %v2035 = vpop.f32.mrf.mxu0
    %v2036 = vadd.f32 0.0, %v2035
    %2037 = vmatmul.bf16.gmra.mxu0 %v235
    %v2038 = vpop.f32.mrf.mxu0
    %v2039 = vadd.f32 0.0, %v2038
    %v2040 = vpop.f32.mrf.mxu0
    %v2041 = vadd.f32 0.0, %v2040
    %2042 = vmatmul.bf16.gmra.mxu0 %v236
    %v2043 = vpop.f32.mrf.mxu0
    %v2044 = vadd.f32 0.0, %v2043
    %v2045 = vpop.f32.mrf.mxu0
    %v2046 = vadd.f32 0.0, %v2045
    %2047 = vmatmul.bf16.gmra.mxu0 %v237
    %v2048 = vpop.f32.mrf.mxu0
    %v2049 = vadd.f32 0.0, %v2048
    %v2050 = vpop.f32.mrf.mxu0
    %v2051 = vadd.f32 0.0, %v2050
    %2052 = vmatmul.bf16.gmra.mxu0 %v238
    %v2053 = vpop.f32.mrf.mxu0
    %v2054 = vadd.f32 0.0, %v2053
    %v2055 = vpop.f32.mrf.mxu0
    %v2056 = vadd.f32 0.0, %v2055
    %2057 = vmatmul.bf16.gmra.mxu0 %v239
    %v2058 = vpop.f32.mrf.mxu0
    %v2059 = vadd.f32 0.0, %v2058
    %v2060 = vpop.f32.mrf.mxu0
    %v2061 = vadd.f32 0.0, %v2060
    %2062 = vmatmul.bf16.gmra.mxu0 %v240
    %v2063 = vpop.f32.mrf.mxu0
    %v2064 = vpop.f32.mrf.mxu0
    %2065 = vdwg.mxu0
    %s2066 = scalar_lea.vmem %s6, 128
    %v2067 = vld [vmem:[%s2066] sm:$0xf]
    %v2068 = vld [vmem:[%s2066 + $0x4] sm:$0xf]
    %v2069 = vld [vmem:[%s2066 + $0x8] sm:$0xf]
    %v2070 = vld [vmem:[%s2066 + $0xc] sm:$0xf]
    %v2071 = vld [vmem:[%s2066 + $0x10] sm:$0xf]
    %v2072 = vld [vmem:[%s2066 + $0x14] sm:$0xf]
    %v2073 = vld [vmem:[%s2066 + $0x18] sm:$0xf]
    %v2074 = vld [vmem:[%s2066 + $0x1c] sm:$0xf]
    %v2075 = vld [vmem:[%s2066 + $0x20] sm:$0xf]
    %v2076 = vld [vmem:[%s2066 + $0x24] sm:$0xf]
    %v2077 = vld [vmem:[%s2066 + $0x28] sm:$0xf]
    %v2078 = vld [vmem:[%s2066 + $0x2c] sm:$0xf]
    %v2079 = vld [vmem:[%s2066 + $0x30] sm:$0xf]
    %v2080 = vld [vmem:[%s2066 + $0x34] sm:$0xf]
    %v2081 = vld [vmem:[%s2066 + $0x38] sm:$0xf]
    %v2082 = vld [vmem:[%s2066 + $0x3c] sm:$0xf]
    %s2083 = scalar_lea.vmem %s7, 2
    %v2084 = vld [vmem:[%s2083] sm:$0x1]
    %v2086 = vperm.slane %v2084, 0
    %v2104 = vunpack.c.l.b16 %v2067
    %v2105 = vunpack.c.l.b16 %v2068
    %v2106 = vunpack.c.l.b16 %v2069
    %v2107 = vunpack.c.l.b16 %v2070
    %v2108 = vunpack.c.l.b16 %v2071
    %v2109 = vunpack.c.l.b16 %v2072
    %v2110 = vunpack.c.l.b16 %v2073
    %v2111 = vunpack.c.l.b16 %v2074
    %v2112 = vunpack.c.l.b16 %v2075
    %v2113 = vunpack.c.l.b16 %v2076
    %v2114 = vunpack.c.l.b16 %v2077
    %v2115 = vunpack.c.l.b16 %v2078
    %v2116 = vunpack.c.l.b16 %v2079
    %v2117 = vunpack.c.l.b16 %v2080
    %v2118 = vunpack.c.l.b16 %v2081
    %v2119 = vunpack.c.l.b16 %v2082
    %v2120 = vpack.c.b16 %v2105, %v2104
    %v2121 = vpack.c.b16 %v2107, %v2106
    %v2122 = vpack.c.b16 %v2109, %v2108
    %v2123 = vpack.c.b16 %v2111, %v2110
    %v2124 = vpack.c.b16 %v2113, %v2112
    %v2125 = vpack.c.b16 %v2115, %v2114
    %v2126 = vpack.c.b16 %v2117, %v2116
    %v2127 = vpack.c.b16 %v2119, %v2118
    %2136 = vmatpush.bf16.msra.mxu0 %v2127
    %2137 = vmatpush.bf16.msra.mxu0 %v2126
    %2138 = vmatpush.bf16.msra.mxu0 %v2125
    %2139 = vmatpush.bf16.msra.mxu0 %v2124
    %2140 = vmatpush.bf16.msra.mxu0 %v2123
    %2141 = vmatpush.bf16.msra.mxu0 %v2122
    %2142 = vmatpush.bf16.msra.mxu0 %v2121
    %2143 = vmatpush.bf16.msra.mxu0 %v2120
    %2144 = vmatmul.bf16.gmra.mxu0 %v355
    %v2145 = vpop.f32.mrf.mxu0
    %v2146 = vadd.f32 %v2086, %v2145
    %v2147 = vpop.f32.mrf.mxu0
    %v2148 = vadd.f32 %v2086, %v2147
    %2149 = vmatmul.bf16.gmra.mxu0 %v356
    %v2150 = vpop.f32.mrf.mxu0
    %v2151 = vadd.f32 %v2086, %v2150
    %v2152 = vpop.f32.mrf.mxu0
    %v2153 = vadd.f32 %v2086, %v2152
    %2154 = vmatmul.bf16.gmra.mxu0 %v357
    %v2155 = vpop.f32.mrf.mxu0
    %v2156 = vadd.f32 %v2086, %v2155
    %v2157 = vpop.f32.mrf.mxu0
    %v2158 = vadd.f32 %v2086, %v2157
    %2159 = vmatmul.bf16.gmra.mxu0 %v358
    %v2160 = vpop.f32.mrf.mxu0
    %v2161 = vadd.f32 %v2086, %v2160
    %v2162 = vpop.f32.mrf.mxu0
    %v2163 = vadd.f32 %v2086, %v2162
    %2164 = vmatmul.bf16.gmra.mxu0 %v359
    %v2165 = vpop.f32.mrf.mxu0
    %v2166 = vadd.f32 %v2086, %v2165
    %v2167 = vpop.f32.mrf.mxu0
    %v2168 = vadd.f32 %v2086, %v2167
    %2169 = vmatmul.bf16.gmra.mxu0 %v360
    %v2170 = vpop.f32.mrf.mxu0
    %v2171 = vadd.f32 %v2086, %v2170
    %v2172 = vpop.f32.mrf.mxu0
    %v2173 = vadd.f32 %v2086, %v2172
    %2174 = vmatmul.bf16.gmra.mxu0 %v361
    %v2175 = vpop.f32.mrf.mxu0
    %v2176 = vadd.f32 %v2086, %v2175
    %v2177 = vpop.f32.mrf.mxu0
    %v2178 = vadd.f32 %v2086, %v2177
    %2179 = vmatmul.bf16.gmra.mxu0 %v362
    %v2180 = vpop.f32.mrf.mxu0
    %v2181 = vadd.f32 %v2086, %v2180
    %v2182 = vpop.f32.mrf.mxu0
    %v2183 = vadd.f32 %v2086, %v2182
    %2184 = vdwg.mxu0
    %v2185 = vadd.f32 %v2024, %v2146
    %v2186 = vadd.f32 %v2026, %v2148
    %v2187 = vadd.f32 %v2029, %v2151
    %v2188 = vadd.f32 %v2031, %v2153
    %v2189 = vadd.f32 %v2034, %v2156
    %v2190 = vadd.f32 %v2036, %v2158
    %v2191 = vadd.f32 %v2039, %v2161
    %v2192 = vadd.f32 %v2041, %v2163
    %v2193 = vadd.f32 %v2044, %v2166
    %v2194 = vadd.f32 %v2046, %v2168
    %v2195 = vadd.f32 %v2049, %v2171
    %v2196 = vadd.f32 %v2051, %v2173
    %v2197 = vadd.f32 %v2054, %v2176
    %v2198 = vadd.f32 %v2056, %v2178
    %v2199 = vadd.f32 %v2059, %v2181
    %v2200 = vadd.f32 %v2061, %v2183
    %v2201 = vmax.f32 %v2185, 0.0
    %v2202 = vmax.f32 %v2186, 0.0
    %v2203 = vmax.f32 %v2187, 0.0
    %v2204 = vmax.f32 %v2188, 0.0
    %v2205 = vmax.f32 %v2189, 0.0
    %v2206 = vmax.f32 %v2190, 0.0
    %v2207 = vmax.f32 %v2191, 0.0
    %v2208 = vmax.f32 %v2192, 0.0
    %v2209 = vmax.f32 %v2193, 0.0
    %v2210 = vmax.f32 %v2194, 0.0
    %v2211 = vmax.f32 %v2195, 0.0
    %v2212 = vmax.f32 %v2196, 0.0
    %v2213 = vmax.f32 %v2197, 0.0
    %v2214 = vmax.f32 %v2198, 0.0
    %v2215 = vmax.f32 %v2199, 0.0
    %v2216 = vmax.f32 %v2200, 0.0
    %v2217 = vpack.c.bf16 %v2202, %v2201
    %v2218 = vpack.c.bf16 %v2204, %v2203
    %v2219 = vpack.c.bf16 %v2206, %v2205
    %v2220 = vpack.c.bf16 %v2208, %v2207
    %v2221 = vpack.c.bf16 %v2210, %v2209
    %v2222 = vpack.c.bf16 %v2212, %v2211
    %v2223 = vpack.c.bf16 %v2214, %v2213
    %v2224 = vpack.c.bf16 %v2216, %v2215
    %s2225 = sadd.f32 %s1936, 1.0
    %v2226 = vstv %s2225
    %v2227 = vmul.f32 %v2226, %v1990
    %v2228 = vmul.f32 %v2226, %v1991
    %v2229 = vmul.f32 %v2226, %v1992
    %v2230 = vmul.f32 %v2226, %v1993
    %v2231 = vmul.f32 %v2226, %v1994
    %v2232 = vmul.f32 %v2226, %v1995
    %v2233 = vmul.f32 %v2226, %v1996
    %v2234 = vmul.f32 %v2226, %v1997
    %v2235 = vmul.f32 %v2226, %v1998
    %v2236 = vmul.f32 %v2226, %v1999
    %v2237 = vmul.f32 %v2226, %v2000
    %v2238 = vmul.f32 %v2226, %v2001
    %v2239 = vmul.f32 %v2226, %v2002
    %v2240 = vmul.f32 %v2226, %v2003
    %v2241 = vmul.f32 %v2226, %v2004
    %v2242 = vmul.f32 %v2226, %v2005
    %2243 = vmatpush.bf16.msra.mxu0 %v2224
    %2244 = vmatpush.bf16.msra.mxu0 %v2223
    %2245 = vmatpush.bf16.msra.mxu0 %v2222
    %2246 = vmatpush.bf16.msra.mxu0 %v2221
    %2247 = vmatpush.bf16.msra.mxu0 %v2220
    %2248 = vmatpush.bf16.msra.mxu0 %v2219
    %2249 = vmatpush.bf16.msra.mxu0 %v2218
    %2250 = vmatpush.bf16.msra.mxu0 %v2217
    %2251 = vmatmul.bf16.gmra.mxu0 %v558
    %v2252 = vpop.f32.mrf.mxu0
    %v2253 = vadd.f32 %v2227, %v2252
    %v2254 = vpop.f32.mrf.mxu0
    %v2255 = vadd.f32 %v2228, %v2254
    %2256 = vmatmul.bf16.gmra.mxu0 %v559
    %v2257 = vpop.f32.mrf.mxu0
    %v2258 = vadd.f32 %v2229, %v2257
    %v2259 = vpop.f32.mrf.mxu0
    %v2260 = vadd.f32 %v2230, %v2259
    %2261 = vmatmul.bf16.gmra.mxu0 %v560
    %v2262 = vpop.f32.mrf.mxu0
    %v2263 = vadd.f32 %v2231, %v2262
    %v2264 = vpop.f32.mrf.mxu0
    %v2265 = vadd.f32 %v2232, %v2264
    %2266 = vmatmul.bf16.gmra.mxu0 %v561
    %v2267 = vpop.f32.mrf.mxu0
    %v2268 = vadd.f32 %v2233, %v2267
    %v2269 = vpop.f32.mrf.mxu0
    %v2270 = vadd.f32 %v2234, %v2269
    %2271 = vmatmul.bf16.gmra.mxu0 %v562
    %v2272 = vpop.f32.mrf.mxu0
    %v2273 = vadd.f32 %v2235, %v2272
    %v2274 = vpop.f32.mrf.mxu0
    %v2275 = vadd.f32 %v2236, %v2274
    %2276 = vmatmul.bf16.gmra.mxu0 %v563
    %v2277 = vpop.f32.mrf.mxu0
    %v2278 = vadd.f32 %v2237, %v2277
    %v2279 = vpop.f32.mrf.mxu0
    %v2280 = vadd.f32 %v2238, %v2279
    %2281 = vmatmul.bf16.gmra.mxu0 %v564
    %v2282 = vpop.f32.mrf.mxu0
    %v2283 = vadd.f32 %v2239, %v2282
    %v2284 = vpop.f32.mrf.mxu0
    %v2285 = vadd.f32 %v2240, %v2284
    %2286 = vmatmul.bf16.gmra.mxu0 %v565
    %v2287 = vpop.f32.mrf.mxu0
    %v2288 = vadd.f32 %v2241, %v2287
    %v2289 = vpop.f32.mrf.mxu0
    %v2290 = vadd.f32 %v2242, %v2289
    %2291 = vdwg.mxu0
    %s2292 = scalar_lea.vmem %s8, 128
    %v2293 = vld [vmem:[%s2292] sm:$0xf]
    %v2294 = vld [vmem:[%s2292 + $0x4] sm:$0xf]
    %v2295 = vld [vmem:[%s2292 + $0x8] sm:$0xf]
    %v2296 = vld [vmem:[%s2292 + $0xc] sm:$0xf]
    %v2297 = vld [vmem:[%s2292 + $0x10] sm:$0xf]
    %v2298 = vld [vmem:[%s2292 + $0x14] sm:$0xf]
    %v2299 = vld [vmem:[%s2292 + $0x18] sm:$0xf]
    %v2300 = vld [vmem:[%s2292 + $0x1c] sm:$0xf]
    %v2301 = vld [vmem:[%s2292 + $0x20] sm:$0xf]
    %v2302 = vld [vmem:[%s2292 + $0x24] sm:$0xf]
    %v2303 = vld [vmem:[%s2292 + $0x28] sm:$0xf]
    %v2304 = vld [vmem:[%s2292 + $0x2c] sm:$0xf]
    %v2305 = vld [vmem:[%s2292 + $0x30] sm:$0xf]
    %v2306 = vld [vmem:[%s2292 + $0x34] sm:$0xf]
    %v2307 = vld [vmem:[%s2292 + $0x38] sm:$0xf]
    %v2308 = vld [vmem:[%s2292 + $0x3c] sm:$0xf]
    %v2309 = vpack.c.bf16 %v2255, %v2253
    %v2310 = vpack.c.bf16 %v2260, %v2258
    %v2311 = vpack.c.bf16 %v2265, %v2263
    %v2312 = vpack.c.bf16 %v2270, %v2268
    %v2313 = vpack.c.bf16 %v2275, %v2273
    %v2314 = vpack.c.bf16 %v2280, %v2278
    %v2315 = vpack.c.bf16 %v2285, %v2283
    %v2316 = vpack.c.bf16 %v2290, %v2288
    %s2317 = scalar_lea.vmem %s9, 2
    %v2318 = vld [vmem:[%s2317] sm:$0x1]
    %v2320 = vperm.slane %v2318, 0
    %v2338 = vunpack.c.l.b16 %v2293
    %v2339 = vunpack.c.l.b16 %v2294
    %v2340 = vunpack.c.l.b16 %v2295
    %v2341 = vunpack.c.l.b16 %v2296
    %v2342 = vunpack.c.l.b16 %v2297
    %v2343 = vunpack.c.l.b16 %v2298
    %v2344 = vunpack.c.l.b16 %v2299
    %v2345 = vunpack.c.l.b16 %v2300
    %v2346 = vunpack.c.l.b16 %v2301
    %v2347 = vunpack.c.l.b16 %v2302
    %v2348 = vunpack.c.l.b16 %v2303
    %v2349 = vunpack.c.l.b16 %v2304
    %v2350 = vunpack.c.l.b16 %v2305
    %v2351 = vunpack.c.l.b16 %v2306
    %v2352 = vunpack.c.l.b16 %v2307
    %v2353 = vunpack.c.l.b16 %v2308
    %v2354 = vpack.c.b16 %v2339, %v2338
    %v2355 = vpack.c.b16 %v2341, %v2340
    %v2356 = vpack.c.b16 %v2343, %v2342
    %v2357 = vpack.c.b16 %v2345, %v2344
    %v2358 = vpack.c.b16 %v2347, %v2346
    %v2359 = vpack.c.b16 %v2349, %v2348
    %v2360 = vpack.c.b16 %v2351, %v2350
    %v2361 = vpack.c.b16 %v2353, %v2352
    %2370 = vmatpush.bf16.msra.mxu0 %v2361
    %2371 = vmatpush.bf16.msra.mxu0 %v2360
    %2372 = vmatpush.bf16.msra.mxu0 %v2359
    %2373 = vmatpush.bf16.msra.mxu0 %v2358
    %2374 = vmatpush.bf16.msra.mxu0 %v2357
    %2375 = vmatpush.bf16.msra.mxu0 %v2356
    %2376 = vmatpush.bf16.msra.mxu0 %v2355
    %2377 = vmatpush.bf16.msra.mxu0 %v2354
    %2378 = vmatmul.bf16.gmra.mxu0 %v2309
    %v2379 = vpop.f32.mrf.mxu0
    %v2380 = vadd.f32 %v2320, %v2379
    %v2381 = vpop.f32.mrf.mxu0
    %v2382 = vadd.f32 %v2320, %v2381
    %2383 = vmatmul.bf16.gmra.mxu0 %v2310
    %v2384 = vpop.f32.mrf.mxu0
    %v2385 = vadd.f32 %v2320, %v2384
    %v2386 = vpop.f32.mrf.mxu0
    %v2387 = vadd.f32 %v2320, %v2386
    %2388 = vmatmul.bf16.gmra.mxu0 %v2311
    %v2389 = vpop.f32.mrf.mxu0
    %v2390 = vadd.f32 %v2320, %v2389
    %v2391 = vpop.f32.mrf.mxu0
    %v2392 = vadd.f32 %v2320, %v2391
    %2393 = vmatmul.bf16.gmra.mxu0 %v2312
    %v2394 = vpop.f32.mrf.mxu0
    %v2395 = vadd.f32 %v2320, %v2394
    %v2396 = vpop.f32.mrf.mxu0
    %v2397 = vadd.f32 %v2320, %v2396
    %2398 = vmatmul.bf16.gmra.mxu0 %v2313
    %v2399 = vpop.f32.mrf.mxu0
    %v2400 = vadd.f32 %v2320, %v2399
    %v2401 = vpop.f32.mrf.mxu0
    %v2402 = vadd.f32 %v2320, %v2401
    %2403 = vmatmul.bf16.gmra.mxu0 %v2314
    %v2404 = vpop.f32.mrf.mxu0
    %v2405 = vadd.f32 %v2320, %v2404
    %v2406 = vpop.f32.mrf.mxu0
    %v2407 = vadd.f32 %v2320, %v2406
    %2408 = vmatmul.bf16.gmra.mxu0 %v2315
    %v2409 = vpop.f32.mrf.mxu0
    %v2410 = vadd.f32 %v2320, %v2409
    %v2411 = vpop.f32.mrf.mxu0
    %v2412 = vadd.f32 %v2320, %v2411
    %2413 = vmatmul.bf16.gmra.mxu0 %v2316
    %v2414 = vpop.f32.mrf.mxu0
    %v2415 = vadd.f32 %v2320, %v2414
    %v2416 = vpop.f32.mrf.mxu0
    %v2417 = vadd.f32 %v2320, %v2416
    %2418 = vdwg.mxu0
    %v2419 = vmax.f32 %v2380, 0.0
    %v2420 = vmax.f32 %v2382, 0.0
    %v2421 = vmax.f32 %v2385, 0.0
    %v2422 = vmax.f32 %v2387, 0.0
    %v2423 = vmax.f32 %v2390, 0.0
    %v2424 = vmax.f32 %v2392, 0.0
    %v2425 = vmax.f32 %v2395, 0.0
    %v2426 = vmax.f32 %v2397, 0.0
    %v2427 = vmax.f32 %v2400, 0.0
    %v2428 = vmax.f32 %v2402, 0.0
    %v2429 = vmax.f32 %v2405, 0.0
    %v2430 = vmax.f32 %v2407, 0.0
    %v2431 = vmax.f32 %v2410, 0.0
    %v2432 = vmax.f32 %v2412, 0.0
    %v2433 = vmax.f32 %v2415, 0.0
    %v2434 = vmax.f32 %v2417, 0.0
    %s2435 = scalar_lea.vmem %s10, 128
    %v2436 = vld [vmem:[%s2435] sm:$0xf]
    %v2437 = vld [vmem:[%s2435 + $0x4] sm:$0xf]
    %v2438 = vld [vmem:[%s2435 + $0x8] sm:$0xf]
    %v2439 = vld [vmem:[%s2435 + $0xc] sm:$0xf]
    %v2440 = vld [vmem:[%s2435 + $0x10] sm:$0xf]
    %v2441 = vld [vmem:[%s2435 + $0x14] sm:$0xf]
    %v2442 = vld [vmem:[%s2435 + $0x18] sm:$0xf]
    %v2443 = vld [vmem:[%s2435 + $0x1c] sm:$0xf]
    %v2444 = vld [vmem:[%s2435 + $0x20] sm:$0xf]
    %v2445 = vld [vmem:[%s2435 + $0x24] sm:$0xf]
    %v2446 = vld [vmem:[%s2435 + $0x28] sm:$0xf]
    %v2447 = vld [vmem:[%s2435 + $0x2c] sm:$0xf]
    %v2448 = vld [vmem:[%s2435 + $0x30] sm:$0xf]
    %v2449 = vld [vmem:[%s2435 + $0x34] sm:$0xf]
    %v2450 = vld [vmem:[%s2435 + $0x38] sm:$0xf]
    %v2451 = vld [vmem:[%s2435 + $0x3c] sm:$0xf]
    %v2452 = vpack.c.bf16 %v2420, %v2419
    %v2453 = vpack.c.bf16 %v2422, %v2421
    %v2454 = vpack.c.bf16 %v2424, %v2423
    %v2455 = vpack.c.bf16 %v2426, %v2425
    %v2456 = vpack.c.bf16 %v2428, %v2427
    %v2457 = vpack.c.bf16 %v2430, %v2429
    %v2458 = vpack.c.bf16 %v2432, %v2431
    %v2459 = vpack.c.bf16 %v2434, %v2433
    %s2460 = scalar_lea.vmem %s11, 2
    %v2461 = vld [vmem:[%s2460] sm:$0x1]
    %v2463 = vperm.slane %v2461, 0
    %v2481 = vunpack.c.l.b16 %v2436
    %v2482 = vunpack.c.l.b16 %v2437
    %v2483 = vunpack.c.l.b16 %v2438
    %v2484 = vunpack.c.l.b16 %v2439
    %v2485 = vunpack.c.l.b16 %v2440
    %v2486 = vunpack.c.l.b16 %v2441
    %v2487 = vunpack.c.l.b16 %v2442
    %v2488 = vunpack.c.l.b16 %v2443
    %v2489 = vunpack.c.l.b16 %v2444
    %v2490 = vunpack.c.l.b16 %v2445
    %v2491 = vunpack.c.l.b16 %v2446
    %v2492 = vunpack.c.l.b16 %v2447
    %v2493 = vunpack.c.l.b16 %v2448
    %v2494 = vunpack.c.l.b16 %v2449
    %v2495 = vunpack.c.l.b16 %v2450
    %v2496 = vunpack.c.l.b16 %v2451
    %v2497 = vpack.c.b16 %v2482, %v2481
    %v2498 = vpack.c.b16 %v2484, %v2483
    %v2499 = vpack.c.b16 %v2486, %v2485
    %v2500 = vpack.c.b16 %v2488, %v2487
    %v2501 = vpack.c.b16 %v2490, %v2489
    %v2502 = vpack.c.b16 %v2492, %v2491
    %v2503 = vpack.c.b16 %v2494, %v2493
    %v2504 = vpack.c.b16 %v2496, %v2495
    %2513 = vmatpush.bf16.msra.mxu0 %v2504
    %2514 = vmatpush.bf16.msra.mxu0 %v2503
    %2515 = vmatpush.bf16.msra.mxu0 %v2502
    %2516 = vmatpush.bf16.msra.mxu0 %v2501
    %2517 = vmatpush.bf16.msra.mxu0 %v2500
    %2518 = vmatpush.bf16.msra.mxu0 %v2499
    %2519 = vmatpush.bf16.msra.mxu0 %v2498
    %2520 = vmatpush.bf16.msra.mxu0 %v2497
    %2521 = vmatmul.bf16.gmra.mxu0 %v2452
    %v2522 = vpop.f32.mrf.mxu0
    %v2523 = vadd.f32 %v2463, %v2522
    %v2524 = vpop.f32.mrf.mxu0
    %v2525 = vadd.f32 %v2463, %v2524
    %2526 = vmatmul.bf16.gmra.mxu0 %v2453
    %v2527 = vpop.f32.mrf.mxu0
    %v2528 = vadd.f32 %v2463, %v2527
    %v2529 = vpop.f32.mrf.mxu0
    %v2530 = vadd.f32 %v2463, %v2529
    %2531 = vmatmul.bf16.gmra.mxu0 %v2454
    %v2532 = vpop.f32.mrf.mxu0
    %v2533 = vadd.f32 %v2463, %v2532
    %v2534 = vpop.f32.mrf.mxu0
    %v2535 = vadd.f32 %v2463, %v2534
    %2536 = vmatmul.bf16.gmra.mxu0 %v2455
    %v2537 = vpop.f32.mrf.mxu0
    %v2538 = vadd.f32 %v2463, %v2537
    %v2539 = vpop.f32.mrf.mxu0
    %v2540 = vadd.f32 %v2463, %v2539
    %2541 = vmatmul.bf16.gmra.mxu0 %v2456
    %v2542 = vpop.f32.mrf.mxu0
    %v2543 = vadd.f32 %v2463, %v2542
    %v2544 = vpop.f32.mrf.mxu0
    %v2545 = vadd.f32 %v2463, %v2544
    %2546 = vmatmul.bf16.gmra.mxu0 %v2457
    %v2547 = vpop.f32.mrf.mxu0
    %v2548 = vadd.f32 %v2463, %v2547
    %v2549 = vpop.f32.mrf.mxu0
    %v2550 = vadd.f32 %v2463, %v2549
    %2551 = vmatmul.bf16.gmra.mxu0 %v2458
    %v2552 = vpop.f32.mrf.mxu0
    %v2553 = vadd.f32 %v2463, %v2552
    %v2554 = vpop.f32.mrf.mxu0
    %v2555 = vadd.f32 %v2463, %v2554
    %2556 = vmatmul.bf16.gmra.mxu0 %v2459
    %v2557 = vpop.f32.mrf.mxu0
    %v2558 = vadd.f32 %v2463, %v2557
    %v2559 = vpop.f32.mrf.mxu0
    %v2560 = vadd.f32 %v2463, %v2559
    %2561 = vdwg.mxu0
    %v2562 = vld [vmem:[%s16] sm:$0xf]
    %v2563 = vpack.c.bf16 %v2525, %v2523
    %v2564 = vpack.c.bf16 %v2530, %v2528
    %v2565 = vpack.c.bf16 %v2535, %v2533
    %v2566 = vpack.c.bf16 %v2540, %v2538
    %v2567 = vpack.c.bf16 %v2545, %v2543
    %v2568 = vpack.c.bf16 %v2550, %v2548
    %v2569 = vpack.c.bf16 %v2555, %v2553
    %v2570 = vpack.c.bf16 %v2560, %v2558
    %2571 = vmatpush.bf16.msra.mxu0 %v2570
    %2572 = vmatpush.bf16.msra.mxu0 %v2569
    %2573 = vmatpush.bf16.msra.mxu0 %v2568
    %2574 = vmatpush.bf16.msra.mxu0 %v2567
    %2575 = vmatpush.bf16.msra.mxu0 %v2566
    %2576 = vmatpush.bf16.msra.mxu0 %v2565
    %2577 = vmatpush.bf16.msra.mxu0 %v2564
    %2578 = vmatpush.bf16.msra.mxu0 %v2563
    %2579 = vmatmul.bf16.gmra.mxu0 %v2562
    %v2580 = vpop.f32.mrf.mxu0
    %v2581 = vadd.f32 0.0, %v2580
    %v2582 = vpop.f32.mrf.mxu0
    %2583 = vdwg.mxu0
    %v2584 = vld [vmem:[%s17] sm:$0xf]
    %v2585 = vld [vmem:[%s17 + $0x4] sm:$0xf]
    %v2586 = vld [vmem:[%s17 + $0x8] sm:$0xf]
    %v2587 = vld [vmem:[%s17 + $0xc] sm:$0xf]
    %v2588 = vld [vmem:[%s17 + $0x10] sm:$0xf]
    %v2589 = vld [vmem:[%s17 + $0x14] sm:$0xf]
    %v2590 = vld [vmem:[%s17 + $0x18] sm:$0xf]
    %v2591 = vld [vmem:[%s17 + $0x1c] sm:$0xf]
    %v2592 = vld [vmem:[%s17 + $0x20] sm:$0xf]
    %v2593 = vld [vmem:[%s17 + $0x24] sm:$0xf]
    %v2594 = vld [vmem:[%s17 + $0x28] sm:$0xf]
    %v2595 = vld [vmem:[%s17 + $0x2c] sm:$0xf]
    %v2596 = vld [vmem:[%s17 + $0x30] sm:$0xf]
    %v2597 = vld [vmem:[%s17 + $0x34] sm:$0xf]
    %v2598 = vld [vmem:[%s17 + $0x38] sm:$0xf]
    %v2599 = vld [vmem:[%s17 + $0x3c] sm:$0xf]
    %v2600 = vpack.c.bf16 %v2581, %v2581
    %v2601 = vld [vmem:[%s18] sm:$0x1]
    %v2603 = vperm.slane %v2601, 0
    %v2621 = vunpack.c.l.b16 %v2584
    %v2622 = vunpack.c.l.b16 %v2585
    %v2623 = vunpack.c.l.b16 %v2586
    %v2624 = vunpack.c.l.b16 %v2587
    %v2625 = vunpack.c.l.b16 %v2588
    %v2626 = vunpack.c.l.b16 %v2589
    %v2627 = vunpack.c.l.b16 %v2590
    %v2628 = vunpack.c.l.b16 %v2591
    %v2629 = vunpack.c.l.b16 %v2592
    %v2630 = vunpack.c.l.b16 %v2593
    %v2631 = vunpack.c.l.b16 %v2594
    %v2632 = vunpack.c.l.b16 %v2595
    %v2633 = vunpack.c.l.b16 %v2596
    %v2634 = vunpack.c.l.b16 %v2597
    %v2635 = vunpack.c.l.b16 %v2598
    %v2636 = vunpack.c.l.b16 %v2599
    %v2637 = vpack.c.b16 %v2622, %v2621
    %v2638 = vpack.c.b16 %v2624, %v2623
    %v2639 = vpack.c.b16 %v2626, %v2625
    %v2640 = vpack.c.b16 %v2628, %v2627
    %v2641 = vpack.c.b16 %v2630, %v2629
    %v2642 = vpack.c.b16 %v2632, %v2631
    %v2643 = vpack.c.b16 %v2634, %v2633
    %v2644 = vpack.c.b16 %v2636, %v2635
    %2653 = vmatpush.bf16.msra.mxu0 %v2644
    %2654 = vmatpush.bf16.msra.mxu0 %v2643
    %2655 = vmatpush.bf16.msra.mxu0 %v2642
    %2656 = vmatpush.bf16.msra.mxu0 %v2641
    %2657 = vmatpush.bf16.msra.mxu0 %v2640
    %2658 = vmatpush.bf16.msra.mxu0 %v2639
    %2659 = vmatpush.bf16.msra.mxu0 %v2638
    %2660 = vmatpush.bf16.msra.mxu0 %v2637
    %2661 = vmatmul.bf16.gmra.mxu0 %v2600
    %v2662 = vpop.f32.mrf.mxu0
    %v2663 = vadd.f32 %v2603, %v2662
    %v2664 = vpop.f32.mrf.mxu0
    %2665 = vdwg.mxu0
    %2666 = vst [vmem:[%s19] sm:$0xff] %v2663
    // Predicated region
    $region90: #{virtualnode_net_forward.1} parent=1 // pred_check
      _
    $region91: #{virtualnode_net_forward.1} parent=1 // pred_check_branch
      %2668 = sbr.rel (0) target = $region93
    $region92: #{virtualnode_net_forward.1} parent=1 // pred_region
      _
    $region93: #{virtualnode_net_forward.1} parent=1 // pred_fallthru
      _
    // Predicated region
    $region94: #{virtualnode_net_forward.1} parent=1 // pred_check
      _
    $region95: #{virtualnode_net_forward.1} parent=1 // pred_check_branch
      %2670 = sbr.rel (0) target = $region97
    $region96: #{virtualnode_net_forward.1} parent=1 // pred_region
      _
    $region97: #{virtualnode_net_forward.1} parent=1 // pred_fallthru
      _
    %2671 = vsyncpa [#allocation3], 1
    %2672 = vsyncpa [#allocation7], 1
    %2673 = vsyncpa [#allocation4], 1

</llo_original>
